<compile_context>
chip_gen: v7x
topology: tpu7x:2x2x1
jax: 0.10.0
libtpu: 0.0.40
codegen_flags: <defaults>
</compile_context>

<pallas_src>
import functools

import jax
import jax.numpy as jnp
from jax import lax
from jax.experimental import pallas as pl
from jax.experimental.pallas import tpu as pltpu


OUT_PAD = 128   # lane-padded width of the per-image linear output


# ------------------------------ fused forward kernel -------------------------------
def _decoder_kernel(x_ref, band_ref, cb_ref, s_ref, t_ref, lw_ref, lb_ref,
                    o_ref, xp_ref, *, C):
    # x_ref   : (1, H, PWC)      P lane-packed images (image p in lanes [p*WC,(p+1)*WC))
    # band_ref: (3, PWC, PWC)    bf16 block-diag banded conv weight per ky (side halo folded)
    # cb_ref  : (1, PWC)         conv bias tiled over (P, W)                        (f32)
    # s_ref   : (1, PWC)         BN scale tiled over (P, W) (eval-mode folded)      (f32)
    # t_ref   : (1, PWC)         BN shift tiled over (P, W)                         (f32)
    # lw_ref  : (Hh*PWC, P*128)  bf16 linear weight (NCHW flatten order, even-w pool
    #                            selection, per-image block-diag, lane pad folded)
    # lb_ref  : (1, P*128)       linear bias, lane padded                           (f32)
    # o_ref   : (1, P*128)
    # xp_ref  : VMEM (H+2, PWC)  f32 row-halo scratch shared by both conv passes
    _, H, PWC = x_ref.shape
    Hh = H // 2

    @pl.when(pl.program_id(0) == 0)
    def _():
        # Scratch persists across grid steps: the interior rows are fully rewritten on
        # every conv pass and the top/bottom halo row is never written, so zeroing
        # once on the first step keeps the halo valid for every step.
        xp_ref[...] = jnp.zeros_like(xp_ref)

    cb = cb_ref[...]
    bs = s_ref[...]
    bt = t_ref[...]

    def conv_bn_relu(v):                          # (H, PWC) f32 -> (H, PWC) f32
        xp_ref[1:H + 1, :] = v                    # lane-aligned full-row interior store
        # 3x3 'same' conv as three accumulating MXU matmuls (rows h-1 / h / h+1 against
        # the per-ky banded weight; the kx taps and the zero side halo live in the band).
        acc = jnp.dot(xp_ref[0:H, :].astype(jnp.bfloat16), band_ref[0],
                      preferred_element_type=jnp.float32)
        acc += jnp.dot(xp_ref[1:H + 1, :].astype(jnp.bfloat16), band_ref[1],
                       preferred_element_type=jnp.float32)
        acc += jnp.dot(xp_ref[2:H + 2, :].astype(jnp.bfloat16), band_ref[2],
                       preferred_element_type=jnp.float32)
        z = (acc + cb) * bs + bt                  # conv bias + BatchNorm (eval, folded)
        return jnp.maximum(z, 0.0)                # ReLU (Dropout2d = identity in eval)

    y = conv_bn_relu(x_ref[0])                    # block 1 (same conv/BN weights reused,
    y = conv_bn_relu(y)                           # block 2  as in the torch module)

    # maxpool 2x2, vectorized: adjacent-row max over the whole slab, then a lane rotate
    # by C (XLU) for the adjacent-column max.  Valid results live at even rows and
    # even-w lanes; odd-w lanes are killed by zero rows folded into lw_ref.
    r = jnp.maximum(y[0:H - 1, :], y[1:H, :])                   # (H-1, PWC)
    m = jnp.maximum(r, pltpu.roll(r, shift=PWC - C, axis=1))    # == left-rotate by C lanes
    m_flat = jnp.concatenate([m[2 * i:2 * i + 1, :] for i in range(Hh)], axis=1)

    out = jnp.dot(m_flat.astype(jnp.bfloat16), lw_ref[...],
                  preferred_element_type=jnp.float32) + lb_ref[...]
    o_ref[...] = out                              # dense (P*128)-lane store


def _fused_call(xg, kp, C):
    G, H, PWC = xg.shape
    band = kp["conv_band"]
    lw = kp["lin_w_flat"]
    lb = kp["lin_b_pad"]
    OUT_P = lb.shape[1]
    kernel = functools.partial(_decoder_kernel, C=C)
    return pl.pallas_call(
        kernel,
        out_shape=jax.ShapeDtypeStruct((G, OUT_P), jnp.float32),
        grid=(G,),
        in_specs=[
            pl.BlockSpec((1, H, PWC), lambda g: (g, 0, 0)),
            pl.BlockSpec(band.shape, lambda g: (0, 0, 0)),
            pl.BlockSpec((1, PWC), lambda g: (0, 0)),
            pl.BlockSpec((1, PWC), lambda g: (0, 0)),
            pl.BlockSpec((1, PWC), lambda g: (0, 0)),
            pl.BlockSpec(lw.shape, lambda g: (0, 0)),
            pl.BlockSpec((1, OUT_P), lambda g: (0, 0)),
        ],
        out_specs=pl.BlockSpec((1, OUT_P), lambda g: (g, 0)),
        scratch_shapes=[pltpu.VMEM((H + 2, PWC), jnp.float32)],
        compiler_params=pltpu.CompilerParams(dimension_semantics=("parallel",)),
    )(xg, band, kp["conv_b_w"], kp["bn_scale_w"], kp["bn_shift_w"], lw, lb)


@functools.partial(jax.jit, static_argnums=(2,))
def decoder_forward(x, kparams, out_features):
    """x: (B, H, W, C) NHWC input (the torch module permutes to NCHW internally)."""
    B, H, W, C = x.shape
    WC = W * C
    PWC = kparams["conv_band"].shape[1]
    P = PWC // WC                                   # images lane-packed per grid step
    out_p = kparams["lin_b_pad"].shape[1] // P      # = OUT_PAD
    # Pack P consecutive images along lanes: image g*P + p -> lanes [p*WC, (p+1)*WC).
    xg = x.reshape(B // P, P, H, WC).transpose(0, 2, 1, 3).reshape(B // P, H, PWC)
    out = _fused_call(xg, kparams, C)               # (B//P, P*OUT_PAD)
    return out.reshape(B // P, P, out_p).reshape(B, out_p)[:, :out_features]


# --------------------- one-time host-side weight preparation -----------------------
def prepare_kernel_params(p, H, W, P):
    C = p["conv_b"].shape[0]
    Hh, Wh = H // 2, W // 2
    O = p["lin_w"].shape[1]
    assert O <= OUT_PAD
    WC = W * C
    PWC = P * WC

    # Banded conv weight per ky with the left/right 'same' zero halo folded in:
    # band_ky[u*C+ci, w*C+co] = conv_w[ky, u-w+1, ci, co] when 0 <= u-w+1 <= 2, else 0.
    bands = []
    for ky in range(3):
        blk = jnp.zeros((W, C, W, C), jnp.float32)
        for kx in range(3):
            e = jnp.eye(W, W, k=1 - kx, dtype=jnp.float32)     # e[u, w] = 1 iff w = u+1-kx
            blk = blk + jnp.einsum("uw,io->uiwo", e, p["conv_w"][ky, kx])
        band = blk.reshape(WC, WC)
        bands.append(jnp.kron(jnp.eye(P, dtype=jnp.float32), band))   # P-image block-diag
    band3 = jnp.stack(bands, axis=0).astype(jnp.bfloat16)             # (3, PWC, PWC)

    # Per-channel vectors tiled over (P, W) so the epilogue broadcasts over (H, PWC).
    tile = lambda v: jnp.tile(v, P * W).reshape(1, PWC)
    cb_w, s_w, t_w = tile(p["conv_b"]), tile(p["bn_scale"]), tile(p["bn_shift"])

    # Linear weight: fold (a) PyTorch's NCHW flatten order, (b) the "even-w lanes only"
    # pooled layout, (c) the P-image block structure and (d) output lane padding.
    w4 = jnp.transpose(p["lin_w"].reshape(C, Hh, Wh, O), (1, 2, 0, 3))    # [i, j, c, o]
    w5 = jnp.zeros((Hh, W, C, O), jnp.float32).at[:, 0::2, :, :].set(w4)  # even w only
    lw6 = jnp.zeros((Hh, P, W, C, P, OUT_PAD), jnp.float32)
    for q in range(P):
        lw6 = lw6.at[:, q, :, :, q, :O].set(w5)
    lw = lw6.reshape(Hh * PWC, P * OUT_PAD).astype(jnp.bfloat16)
    lb = jnp.zeros((P, OUT_PAD), jnp.float32).at[:, :O].set(p["lin_b"]).reshape(1, P * OUT_PAD)

    return dict(conv_band=band3, conv_b_w=cb_w, bn_scale_w=s_w, bn_shift_w=t_w,
                lin_w_flat=lw, lin_b_pad=lb)


# ----------------------- deterministic synthetic parameters ------------------------
def init_params(key, C, out_channels, H, W):
    ks = jax.random.split(key, 8)
    eps = 1e-5
    conv_w = 0.1 * jax.random.normal(ks[0], (3, 3, C, C), jnp.float32)   # HWIO
    conv_b = 0.1 * jax.random.normal(ks[1], (C,), jnp.float32)
    gamma = 1.0 + 0.1 * jax.random.normal(ks[2], (C,), jnp.float32)
    beta = 0.1 * jax.random.normal(ks[3], (C,), jnp.float32)
    run_mean = 0.1 * jax.random.normal(ks[4], (C,), jnp.float32)
    run_var = jnp.abs(jax.random.normal(ks[5], (C,), jnp.float32)) + 0.5
    bn_scale = gamma / jnp.sqrt(run_var + eps)
    bn_shift = beta - run_mean * bn_scale
    # nn.Linear(24192, out) -- in_features adapted to the small synthetic shapes,
    # rows in PyTorch's NCHW flatten order.
    F = C * (H // 2) * (W // 2)
    lin_w = 0.05 * jax.random.normal(ks[6], (F, out_channels), jnp.float32)
    lin_b = 0.05 * jax.random.normal(ks[7], (out_channels,), jnp.float32)
    return dict(conv_w=conv_w, conv_b=conv_b, bn_scale=bn_scale, bn_shift=bn_shift,
                lin_w=lin_w, lin_b=lin_b)


# ------------------------------- pure-JAX reference ---------------------------------
def reference(x, p):
    def conv(z):
        return lax.conv_general_dilated(
            z, p["conv_w"], (1, 1), "SAME",
            dimension_numbers=("NHWC", "HWIO", "NHWC")) + p["conv_b"]

    def bn_relu(z):
        return jnp.maximum(z * p["bn_scale"] + p["bn_shift"], 0.0)

    y = bn_relu(conv(x))
    y = bn_relu(conv(y))
    y = lax.reduce_window(y, -jnp.inf, lax.max, (1, 2, 2, 1), (1, 2, 2, 1), "VALID")
    B = y.shape[0]
    yf = jnp.transpose(y, (0, 3, 1, 2)).reshape(B, -1)     # NCHW flatten (as in torch)
    return yf @ p["lin_w"] + p["lin_b"]


if __name__ == "__main__":
    B, C, H, W, OUT = 2, 4, 16, 16, 8
    key = jax.random.PRNGKey(0)
    kx, kp = jax.random.split(key)
    # Module input is (B, H, W, C): the torch forward itself permutes to NCHW.
    x = jax.random.normal(kx, (B, H, W, C), jnp.float32)
    params = init_params(kp, C, OUT, H, W)

    WC = W * C
    P = 128 // WC if (WC <= 128 and 128 % WC == 0 and B % (128 // WC) == 0) else 1
    kparams = prepare_kernel_params(params, H, W, P)       # one-time weight folding

    out = decoder_forward(x, kparams, OUT)
    out = jax.block_until_ready(out)

    ref = reference(x, params)
    assert out.shape == (B, OUT)
    # bf16 MXU inputs (conv bands, linear weight, dot operands) vs an all-f32
    # reference: expect ~1e-2 absolute differences at these value magnitudes.
    assert jnp.allclose(out, ref, atol=5e-2, rtol=5e-2), (out, ref)
    print("KERNEL_OK")
</pallas_src>

<mosaic_0001>
module attributes {stable_mosaic.version = 11 : i64} {
  func.func @_decoder_kernel(%arg0: i32, %arg1: memref<1x16x128xf32, #tpu.memory_space<vmem>>, %arg2: memref<3x128x128xbf16, #tpu.memory_space<vmem>>, %arg3: memref<1x128xf32, #tpu.memory_space<vmem>>, %arg4: memref<1x128xf32, #tpu.memory_space<vmem>>, %arg5: memref<1x128xf32, #tpu.memory_space<vmem>>, %arg6: memref<1024x256xbf16, #tpu.memory_space<vmem>>, %arg7: memref<1x256xf32, #tpu.memory_space<vmem>>, %arg8: memref<1x256xf32, #tpu.memory_space<vmem>>, %arg9: memref<18x128xf32, #tpu.memory_space<vmem>>) attributes {dimension_semantics = [#tpu.dimension_semantics<parallel>], iteration_bounds = array<i64: 1>, scalar_prefetch = 0 : i64, scratch_operands = 1 : i64, tpu.core_type = #tpu.core_type<tc>, window_params = [{transform_indices = @transform_0, window_bounds = array<i64: 1, 16, 128>}, {pipeline_mode = #tpu.pipeline_mode<synchronous>, transform_indices = @transform_1, window_bounds = array<i64: 3, 128, 128>}, {pipeline_mode = #tpu.pipeline_mode<synchronous>, transform_indices = @transform_2, window_bounds = array<i64: 1, 128>}, {pipeline_mode = #tpu.pipeline_mode<synchronous>, transform_indices = @transform_3, window_bounds = array<i64: 1, 128>}, {pipeline_mode = #tpu.pipeline_mode<synchronous>, transform_indices = @transform_4, window_bounds = array<i64: 1, 128>}, {pipeline_mode = #tpu.pipeline_mode<synchronous>, transform_indices = @transform_5, window_bounds = array<i64: 1024, 256>}, {pipeline_mode = #tpu.pipeline_mode<synchronous>, transform_indices = @transform_6, window_bounds = array<i64: 1, 256>}, {transform_indices = @transform_7, window_bounds = array<i64: 1, 256>}]} {
    %c0_i32 = arith.constant 0 : i32
    %0 = arith.cmpi eq, %arg0, %c0_i32 : i32
    %1 = arith.extui %0 : i1 to i32
    %c0_i32_0 = arith.constant 0 : i32
    %2 = arith.cmpi ne, %1, %c0_i32_0 : i32
    scf.if %2 {
      %cst_55 = arith.constant 0.000000e+00 : f32
      %80 = vector.broadcast %cst_55 : f32 to vector<18x128xf32>
      %c0_56 = arith.constant 0 : index
      %c0_57 = arith.constant 0 : index
      %81 = vector.load %arg9[%c0_56, %c0_57] : memref<18x128xf32, #tpu.memory_space<vmem>>, vector<18x128xf32>
      tpu.vector_store %arg9[%c0_56, %c0_57], %80 {strides = array<i32>} : memref<18x128xf32, #tpu.memory_space<vmem>>, vector<18x128xf32>,
    } else {
    }
    %c0 = arith.constant 0 : index
    %c0_1 = arith.constant 0 : index
    %3 = vector.load %arg3[%c0, %c0_1] : memref<1x128xf32, #tpu.memory_space<vmem>>, vector<1x128xf32>
    %c0_2 = arith.constant 0 : index
    %c0_3 = arith.constant 0 : index
    %4 = vector.load %arg4[%c0_2, %c0_3] : memref<1x128xf32, #tpu.memory_space<vmem>>, vector<1x128xf32>
    %c0_4 = arith.constant 0 : index
    %c0_5 = arith.constant 0 : index
    %5 = vector.load %arg5[%c0_4, %c0_5] : memref<1x128xf32, #tpu.memory_space<vmem>>, vector<1x128xf32>
    %c0_6 = arith.constant 0 : index
    %c0_7 = arith.constant 0 : index
    %c0_8 = arith.constant 0 : index
    %6 = vector.load %arg1[%c0_6, %c0_7, %c0_8] : memref<1x16x128xf32, #tpu.memory_space<vmem>>, vector<1x16x128xf32>
    %7 = vector.shape_cast %6 : vector<1x16x128xf32> to vector<16x128xf32>
    %c1 = arith.constant 1 : index
    %c0_9 = arith.constant 0 : index
    %8 = vector.load %arg9[%c1, %c0_9] : memref<18x128xf32, #tpu.memory_space<vmem>>, vector<16x128xf32>
    tpu.vector_store %arg9[%c1, %c0_9], %7 {strides = array<i32>} : memref<18x128xf32, #tpu.memory_space<vmem>>, vector<16x128xf32>,
    %c0_10 = arith.constant 0 : index
    %c0_11 = arith.constant 0 : index
    %9 = vector.load %arg9[%c0_10, %c0_11] : memref<18x128xf32, #tpu.memory_space<vmem>>, vector<16x128xf32>
    %10 = arith.truncf %9 : vector<16x128xf32> to vector<16x128xbf16>
    %c0_12 = arith.constant 0 : index
    %c0_13 = arith.constant 0 : index
    %c0_14 = arith.constant 0 : index
    %11 = vector.load %arg2[%c0_12, %c0_13, %c0_14] : memref<3x128x128xbf16, #tpu.memory_space<vmem>>, vector<1x128x128xbf16>
    %12 = vector.shape_cast %11 : vector<1x128x128xbf16> to vector<128x128xbf16>
    %cst = arith.constant dense<0.000000e+00> : vector<16x128xf32>
    %13 = tpu.matmul %10, %12, %cst {dimension_numbers = #tpu.dot_dimension_numbers<[1], [0], [0], [1], [0, 0, 1, 1], [], []>} : vector<16x128xbf16>, vector<128x128xbf16>, vector<16x128xf32> -> vector<16x128xf32>
    %c1_15 = arith.constant 1 : index
    %c0_16 = arith.constant 0 : index
    %14 = vector.load %arg9[%c1_15, %c0_16] : memref<18x128xf32, #tpu.memory_space<vmem>>, vector<16x128xf32>
    %15 = arith.truncf %14 : vector<16x128xf32> to vector<16x128xbf16>
    %c1_17 = arith.constant 1 : index
    %c0_18 = arith.constant 0 : index
    %c0_19 = arith.constant 0 : index
    %16 = vector.load %arg2[%c1_17, %c0_18, %c0_19] : memref<3x128x128xbf16, #tpu.memory_space<vmem>>, vector<1x128x128xbf16>
    %17 = vector.shape_cast %16 : vector<1x128x128xbf16> to vector<128x128xbf16>
    %cst_20 = arith.constant dense<0.000000e+00> : vector<16x128xf32>
    %18 = tpu.matmul %15, %17, %cst_20 {dimension_numbers = #tpu.dot_dimension_numbers<[1], [0], [0], [1], [0, 0, 1, 1], [], []>} : vector<16x128xbf16>, vector<128x128xbf16>, vector<16x128xf32> -> vector<16x128xf32>
    %19 = arith.addf %13, %18 : vector<16x128xf32>
    %c2 = arith.constant 2 : index
    %c0_21 = arith.constant 0 : index
    %20 = vector.load %arg9[%c2, %c0_21] : memref<18x128xf32, #tpu.memory_space<vmem>>, vector<16x128xf32>
    %21 = arith.truncf %20 : vector<16x128xf32> to vector<16x128xbf16>
    %c2_22 = arith.constant 2 : index
    %c0_23 = arith.constant 0 : index
    %c0_24 = arith.constant 0 : index
    %22 = vector.load %arg2[%c2_22, %c0_23, %c0_24] : memref<3x128x128xbf16, #tpu.memory_space<vmem>>, vector<1x128x128xbf16>
    %23 = vector.shape_cast %22 : vector<1x128x128xbf16> to vector<128x128xbf16>
    %cst_25 = arith.constant dense<0.000000e+00> : vector<16x128xf32>
    %24 = tpu.matmul %21, %23, %cst_25 {dimension_numbers = #tpu.dot_dimension_numbers<[1], [0], [0], [1], [0, 0, 1, 1], [], []>} : vector<16x128xbf16>, vector<128x128xbf16>, vector<16x128xf32> -> vector<16x128xf32>
    %25 = arith.addf %19, %24 : vector<16x128xf32>
    %26 = vector.broadcast %3 : vector<1x128xf32> to vector<16x128xf32>
    %27 = arith.addf %25, %26 : vector<16x128xf32>
    %28 = vector.broadcast %4 : vector<1x128xf32> to vector<16x128xf32>
    %29 = arith.mulf %27, %28 : vector<16x128xf32>
    %30 = vector.broadcast %5 : vector<1x128xf32> to vector<16x128xf32>
    %31 = arith.addf %29, %30 : vector<16x128xf32>
    %cst_26 = arith.constant 0.000000e+00 : f32
    %32 = vector.broadcast %cst_26 : f32 to vector<16x128xf32>
    %33 = arith.maximumf %31, %32 : vector<16x128xf32>
    %c1_27 = arith.constant 1 : index
    %c0_28 = arith.constant 0 : index
    %34 = vector.load %arg9[%c1_27, %c0_28] : memref<18x128xf32, #tpu.memory_space<vmem>>, vector<16x128xf32>
    tpu.vector_store %arg9[%c1_27, %c0_28], %33 {strides = array<i32>} : memref<18x128xf32, #tpu.memory_space<vmem>>, vector<16x128xf32>,
    %c0_29 = arith.constant 0 : index
    %c0_30 = arith.constant 0 : index
    %35 = vector.load %arg9[%c0_29, %c0_30] : memref<18x128xf32, #tpu.memory_space<vmem>>, vector<16x128xf32>
    %36 = arith.truncf %35 : vector<16x128xf32> to vector<16x128xbf16>
    %c0_31 = arith.constant 0 : index
    %c0_32 = arith.constant 0 : index
    %c0_33 = arith.constant 0 : index
    %37 = vector.load %arg2[%c0_31, %c0_32, %c0_33] : memref<3x128x128xbf16, #tpu.memory_space<vmem>>, vector<1x128x128xbf16>
    %38 = vector.shape_cast %37 : vector<1x128x128xbf16> to vector<128x128xbf16>
    %cst_34 = arith.constant dense<0.000000e+00> : vector<16x128xf32>
    %39 = tpu.matmul %36, %38, %cst_34 {dimension_numbers = #tpu.dot_dimension_numbers<[1], [0], [0], [1], [0, 0, 1, 1], [], []>} : vector<16x128xbf16>, vector<128x128xbf16>, vector<16x128xf32> -> vector<16x128xf32>
    %c1_35 = arith.constant 1 : index
    %c0_36 = arith.constant 0 : index
    %40 = vector.load %arg9[%c1_35, %c0_36] : memref<18x128xf32, #tpu.memory_space<vmem>>, vector<16x128xf32>
    %41 = arith.truncf %40 : vector<16x128xf32> to vector<16x128xbf16>
    %c1_37 = arith.constant 1 : index
    %c0_38 = arith.constant 0 : index
    %c0_39 = arith.constant 0 : index
    %42 = vector.load %arg2[%c1_37, %c0_38, %c0_39] : memref<3x128x128xbf16, #tpu.memory_space<vmem>>, vector<1x128x128xbf16>
    %43 = vector.shape_cast %42 : vector<1x128x128xbf16> to vector<128x128xbf16>
    %cst_40 = arith.constant dense<0.000000e+00> : vector<16x128xf32>
    %44 = tpu.matmul %41, %43, %cst_40 {dimension_numbers = #tpu.dot_dimension_numbers<[1], [0], [0], [1], [0, 0, 1, 1], [], []>} : vector<16x128xbf16>, vector<128x128xbf16>, vector<16x128xf32> -> vector<16x128xf32>
    %45 = arith.addf %39, %44 : vector<16x128xf32>
    %c2_41 = arith.constant 2 : index
    %c0_42 = arith.constant 0 : index
    %46 = vector.load %arg9[%c2_41, %c0_42] : memref<18x128xf32, #tpu.memory_space<vmem>>, vector<16x128xf32>
    %47 = arith.truncf %46 : vector<16x128xf32> to vector<16x128xbf16>
    %c2_43 = arith.constant 2 : index
    %c0_44 = arith.constant 0 : index
    %c0_45 = arith.constant 0 : index
    %48 = vector.load %arg2[%c2_43, %c0_44, %c0_45] : memref<3x128x128xbf16, #tpu.memory_space<vmem>>, vector<1x128x128xbf16>
    %49 = vector.shape_cast %48 : vector<1x128x128xbf16> to vector<128x128xbf16>
    %cst_46 = arith.constant dense<0.000000e+00> : vector<16x128xf32>
    %50 = tpu.matmul %47, %49, %cst_46 {dimension_numbers = #tpu.dot_dimension_numbers<[1], [0], [0], [1], [0, 0, 1, 1], [], []>} : vector<16x128xbf16>, vector<128x128xbf16>, vector<16x128xf32> -> vector<16x128xf32>
    %51 = arith.addf %45, %50 : vector<16x128xf32>
    %52 = vector.broadcast %3 : vector<1x128xf32> to vector<16x128xf32>
    %53 = arith.addf %51, %52 : vector<16x128xf32>
    %54 = vector.broadcast %4 : vector<1x128xf32> to vector<16x128xf32>
    %55 = arith.mulf %53, %54 : vector<16x128xf32>
    %56 = vector.broadcast %5 : vector<1x128xf32> to vector<16x128xf32>
    %57 = arith.addf %55, %56 : vector<16x128xf32>
    %cst_47 = arith.constant 0.000000e+00 : f32
    %58 = vector.broadcast %cst_47 : f32 to vector<16x128xf32>
    %59 = arith.maximumf %57, %58 : vector<16x128xf32>
    %60 = vector.extract_strided_slice %59 {offsets = [0, 0], sizes = [15, 128], strides = [1, 1]} : vector<16x128xf32> to vector<15x128xf32>
    %61 = vector.extract_strided_slice %59 {offsets = [1, 0], sizes = [15, 128], strides = [1, 1]} : vector<16x128xf32> to vector<15x128xf32>
    %62 = arith.maximumf %60, %61 : vector<15x128xf32>
    %c124_i32 = arith.constant 124 : i32
    %63 = tpu.dynamic_rotate %62 by %c124_i32 dim 1 : vector<15x128xf32>, i32 -> vector<15x128xf32>
    %64 = arith.maximumf %62, %63 : vector<15x128xf32>
    %65 = vector.extract_strided_slice %64 {offsets = [0, 0], sizes = [1, 128], strides = [1, 1]} : vector<15x128xf32> to vector<1x128xf32>
    %66 = vector.extract_strided_slice %64 {offsets = [2, 0], sizes = [1, 128], strides = [1, 1]} : vector<15x128xf32> to vector<1x128xf32>
    %67 = vector.extract_strided_slice %64 {offsets = [4, 0], sizes = [1, 128], strides = [1, 1]} : vector<15x128xf32> to vector<1x128xf32>
    %68 = vector.extract_strided_slice %64 {offsets = [6, 0], sizes = [1, 128], strides = [1, 1]} : vector<15x128xf32> to vector<1x128xf32>
    %69 = vector.extract_strided_slice %64 {offsets = [8, 0], sizes = [1, 128], strides = [1, 1]} : vector<15x128xf32> to vector<1x128xf32>
    %70 = vector.extract_strided_slice %64 {offsets = [10, 0], sizes = [1, 128], strides = [1, 1]} : vector<15x128xf32> to vector<1x128xf32>
    %71 = vector.extract_strided_slice %64 {offsets = [12, 0], sizes = [1, 128], strides = [1, 1]} : vector<15x128xf32> to vector<1x128xf32>
    %72 = vector.extract_strided_slice %64 {offsets = [14, 0], sizes = [1, 128], strides = [1, 1]} : vector<15x128xf32> to vector<1x128xf32>
    %73 = tpu.concatenate %65, %66, %67, %68, %69, %70, %71, %72 in 1 : vector<1x128xf32>, vector<1x128xf32>, vector<1x128xf32>, vector<1x128xf32>, vector<1x128xf32>, vector<1x128xf32>, vector<1x128xf32>, vector<1x128xf32> -> vector<1x1024xf32>
    %74 = arith.truncf %73 : vector<1x1024xf32> to vector<1x1024xbf16>
    %c0_48 = arith.constant 0 : index
    %c0_49 = arith.constant 0 : index
    %75 = vector.load %arg6[%c0_48, %c0_49] : memref<1024x256xbf16, #tpu.memory_space<vmem>>, vector<1024x256xbf16>
    %cst_50 = arith.constant dense<0.000000e+00> : vector<1x256xf32>
    %76 = tpu.matmul %74, %75, %cst_50 {dimension_numbers = #tpu.dot_dimension_numbers<[1], [0], [0], [1], [0, 0, 1, 1], [], []>} : vector<1x1024xbf16>, vector<1024x256xbf16>, vector<1x256xf32> -> vector<1x256xf32>
    %c0_51 = arith.constant 0 : index
    %c0_52 = arith.constant 0 : index
    %77 = vector.load %arg7[%c0_51, %c0_52] : memref<1x256xf32, #tpu.memory_space<vmem>>, vector<1x256xf32>
    %78 = arith.addf %76, %77 : vector<1x256xf32>
    %c0_53 = arith.constant 0 : index
    %c0_54 = arith.constant 0 : index
    %79 = vector.load %arg8[%c0_53, %c0_54] : memref<1x256xf32, #tpu.memory_space<vmem>>, vector<1x256xf32>
    tpu.vector_store %arg8[%c0_53, %c0_54], %78 {strides = array<i32>} : memref<1x256xf32, #tpu.memory_space<vmem>>, vector<1x256xf32>,
    return
  }
  func.func @transform_0(%arg0: i32) -> (i32, i32, i32) {
    %c0_i32 = arith.constant 0 : i32
    %c0_i32_0 = arith.constant 0 : i32
    %c0_i32_1 = arith.constant 0 : i32
    return %arg0, %c0_i32, %c0_i32_0 : i32, i32, i32
  }
  func.func @transform_1(%arg0: i32) -> (i32, i32, i32) {
    %c0_i32 = arith.constant 0 : i32
    %c0_i32_0 = arith.constant 0 : i32
    %c0_i32_1 = arith.constant 0 : i32
    %c0_i32_2 = arith.constant 0 : i32
    return %c0_i32, %c0_i32_0, %c0_i32_1 : i32, i32, i32
  }
  func.func @transform_2(%arg0: i32) -> (i32, i32) {
    %c0_i32 = arith.constant 0 : i32
    %c0_i32_0 = arith.constant 0 : i32
    %c0_i32_1 = arith.constant 0 : i32
    return %c0_i32, %c0_i32_0 : i32, i32
  }
  func.func @transform_3(%arg0: i32) -> (i32, i32) {
    %c0_i32 = arith.constant 0 : i32
    %c0_i32_0 = arith.constant 0 : i32
    %c0_i32_1 = arith.constant 0 : i32
    return %c0_i32, %c0_i32_0 : i32, i32
  }
  func.func @transform_4(%arg0: i32) -> (i32, i32) {
    %c0_i32 = arith.constant 0 : i32
    %c0_i32_0 = arith.constant 0 : i32
    %c0_i32_1 = arith.constant 0 : i32
    return %c0_i32, %c0_i32_0 : i32, i32
  }
  func.func @transform_5(%arg0: i32) -> (i32, i32) {
    %c0_i32 = arith.constant 0 : i32
    %c0_i32_0 = arith.constant 0 : i32
    %c0_i32_1 = arith.constant 0 : i32
    return %c0_i32, %c0_i32_0 : i32, i32
  }
  func.func @transform_6(%arg0: i32) -> (i32, i32) {
    %c0_i32 = arith.constant 0 : i32
    %c0_i32_0 = arith.constant 0 : i32
    %c0_i32_1 = arith.constant 0 : i32
    return %c0_i32, %c0_i32_0 : i32, i32
  }
  func.func @transform_7(%arg0: i32) -> (i32, i32) {
    %c0_i32 = arith.constant 0 : i32
    %c0_i32_0 = arith.constant 0 : i32
    return %arg0, %c0_i32 : i32, i32
  }
}

</mosaic_0001>

<llo_original>
// kernel: decoder_forward.1
$region0: #{decoder_forward.1}
  #allocation0 [shape = 'u32[]', space=smem, size = 0x4, offset = 0x4, fixed_abs, tag = 'smem constant byte address 0x4 - core index']
  #allocation1 [shape = 'u32[144,128]{1,0:T(1,128)}', space=vmem, size = 0x12000, scoped, tag = 'internal scratch']
  #allocation2 [shape = 'f32[18,128]{1,0:T(8,128)}', space=vmem, size = 0x3000, scoped, tag = 'scratch operand']
  %s0 = inlined_call_operand.vmem [shape: f32[1,16,128], index: 0, kind: input, shape index: {}]
  %s1 = inlined_call_operand.vmem [shape: bf16[3,128,128], index: 1, kind: input, shape index: {}]
  %s2 = inlined_call_operand.vmem [shape: f32[1,128], index: 2, kind: input, shape index: {}]
  %s3 = inlined_call_operand.vmem [shape: f32[1,128], index: 3, kind: input, shape index: {}]
  %s4 = inlined_call_operand.vmem [shape: f32[1,128], index: 4, kind: input, shape index: {}]
  %s5 = inlined_call_operand.hbm [shape: bf16[1024,256], index: 5, kind: input, shape index: {}]
  %s6 = inlined_call_operand.vmem [shape: f32[1,256], index: 6, kind: input, shape index: {}]
  %s7 = inlined_call_operand.hbm [shape: f32[1,256], index: 7, kind: output, shape index: {}]
  %s8 = sld [smem:[#allocation0]]
  $region46: #{decoder_forward.1} parent=0
    _
  %s10 = ssub.s32 1, %s8
  %s11 = scalar_select 0, %s10, %s8
  $region1: #{decoder_forward.1} parent=0
    #allocation3 [shape = 'u8[524288]{0}', space=vmem, size = 0x80000, scoped, tag = 'input window, operand 5, single buffered']
    #allocation4 [shape = 's32[1]{0}', space=sflag, size = 0x4, scoped, tag = 'scoped memory for decoder_forward.1']
    #allocation5 [shape = 's32[1]{0}', space=sflag, size = 0x4, scoped, tag = 'scoped memory for decoder_forward.1']
    #allocation6 [shape = 'u8[1024]{0}', space=vmem, size = 0x400, scoped, tag = 'output window, operand 0, single buffered']
    %12 = vsyncpa [#allocation4], 0
    %13 = vsyncpa [#allocation5], 0
    // Predicated region
    $region2: #{decoder_forward.1} parent=1 // pred_check
      _
    $region3: #{decoder_forward.1} parent=1 // pred_check_branch
      %15 = sbr.rel (0) target = $region5
    $region4: #{decoder_forward.1} parent=1 // pred_region
      _
    $region5: #{decoder_forward.1} parent=1 // pred_fallthru
      _
    // Predicated region
    $region6: #{decoder_forward.1} parent=1 // pred_check
      _
    $region7: #{decoder_forward.1} parent=1 // pred_check_branch
      %17 = sbr.rel (0) target = $region9
    $region8: #{decoder_forward.1} parent=1 // pred_region
      _
    $region9: #{decoder_forward.1} parent=1 // pred_fallthru
      _
    // Predicated region
    $region10: #{decoder_forward.1} parent=1 // pred_check
      _
    $region11: #{decoder_forward.1} parent=1 // pred_check_branch
      %19 = sbr.rel (0) target = $region13
    $region12: #{decoder_forward.1} parent=1 // pred_region
      _
    $region13: #{decoder_forward.1} parent=1 // pred_fallthru
      _
    // Predicated region
    $region14: #{decoder_forward.1} parent=1 // pred_check
      _
    $region15: #{decoder_forward.1} parent=1 // pred_check_branch
      %21 = sbr.rel (0) target = $region17
    $region16: #{decoder_forward.1} parent=1 // pred_region
      _
    $region17: #{decoder_forward.1} parent=1 // pred_fallthru
      _
    // Predicated region
    $region18: #{decoder_forward.1} parent=1 // pred_check
      _
    $region19: #{decoder_forward.1} parent=1 // pred_check_branch
      %23 = sbr.rel (0) target = $region21
    $region20: #{decoder_forward.1} parent=1 // pred_region
      _
    $region21: #{decoder_forward.1} parent=1 // pred_fallthru
      _
    // Predicated region
    $region22: #{decoder_forward.1} parent=1 // pred_check
      _
    $region23: #{decoder_forward.1} parent=1 // pred_check_branch
      %25 = sbr.rel (0) target = $region25
    $region24: #{decoder_forward.1} parent=1 // pred_region
      %s27 = ssub.s32 16384, 16384
      %28 = vsyncadd [#allocation4], %s27
      %s29 = sshll.u32 [#allocation3], 4
      %s30 = int_to_ptr.vmem [resolvable:$true] %s29
      %35 = dma.hbm_to_vmem [thread:$0]  %s5, 16384, %s30, [#allocation4], 128, 128, 8
    $region25: #{decoder_forward.1} parent=1 // pred_fallthru
      _
    // Predicated region
    $region26: #{decoder_forward.1} parent=1 // pred_check
      _
    $region27: #{decoder_forward.1} parent=1 // pred_check_branch
      %37 = sbr.rel (0) target = $region29
    $region28: #{decoder_forward.1} parent=1 // pred_region
      _
    $region29: #{decoder_forward.1} parent=1 // pred_fallthru
      _
    // Predicated region
    $region30: #{decoder_forward.1} parent=1 // pred_check
      _
    $region31: #{decoder_forward.1} parent=1 // pred_check_branch
      %39 = sbr.rel (0) target = $region33
    $region32: #{decoder_forward.1} parent=1 // pred_region
      %40 = dma.done [#allocation4], 16384
    $region33: #{decoder_forward.1} parent=1 // pred_fallthru
      _
    %p42 = scmp.eq.s32.totalorder 0, 0
    // Predicated region
    $region34: #{decoder_forward.1} parent=1 // pred_check
      %p43 = pneg %p42
    $region35: #{decoder_forward.1} parent=1 // pred_check_branch
      %45 = sbr.rel (%p43) target = $region37
    $region36: #{decoder_forward.1} parent=1 // pred_region
      %46 = vst [vmem:[#allocation2] sm:$0xff] 0.0
      %47 = vst [vmem:[#allocation2 + $0x8] sm:$0xff] 0.0
      %48 = vst [vmem:[#allocation2 + $0x10] sm:$0x3] 0.0
    $region37: #{decoder_forward.1} parent=1 // pred_fallthru
      _
    %v49 = vld [vmem:[%s2] sm:$0x1]
    %v50 = vld [vmem:[%s3] sm:$0x1]
    %v51 = vld [vmem:[%s4] sm:$0x1]
    %v52 = vld [vmem:[%s0] sm:$0xff]
    %v53 = vld [vmem:[%s0 + $0x8] sm:$0xff]
    %54 = vst [vmem:[#allocation2 + $0x1] sm:$0xff] %v52
    %55 = vst [vmem:[#allocation2 + $0x9] sm:$0xff] %v53
    %v56 = vld [vmem:[#allocation2] sm:$0xff]
    %v57 = vld [vmem:[#allocation2 + $0x8] sm:$0xff]
    %v58 = vpack.c.bf16 %v57, %v56
    %v59 = vld [vmem:[%s1] sm:$0xf]
    %v60 = vld [vmem:[%s1 + $0x4] sm:$0xf]
    %v61 = vld [vmem:[%s1 + $0x8] sm:$0xf]
    %v62 = vld [vmem:[%s1 + $0xc] sm:$0xf]
    %v63 = vld [vmem:[%s1 + $0x10] sm:$0xf]
    %v64 = vld [vmem:[%s1 + $0x14] sm:$0xf]
    %v65 = vld [vmem:[%s1 + $0x18] sm:$0xf]
    %v66 = vld [vmem:[%s1 + $0x1c] sm:$0xf]
    %v67 = vld [vmem:[%s1 + $0x20] sm:$0xf]
    %v68 = vld [vmem:[%s1 + $0x24] sm:$0xf]
    %v69 = vld [vmem:[%s1 + $0x28] sm:$0xf]
    %v70 = vld [vmem:[%s1 + $0x2c] sm:$0xf]
    %v71 = vld [vmem:[%s1 + $0x30] sm:$0xf]
    %v72 = vld [vmem:[%s1 + $0x34] sm:$0xf]
    %v73 = vld [vmem:[%s1 + $0x38] sm:$0xf]
    %v74 = vld [vmem:[%s1 + $0x3c] sm:$0xf]
    %v75 = vld [vmem:[#allocation2 + $0x1] sm:$0xff]
    %v76 = vld [vmem:[#allocation2 + $0x9] sm:$0xff]
    %v77 = vpack.c.bf16 %v76, %v75
    %s78 = scalar_lea.vmem %s1, 64
    %v79 = vld [vmem:[%s78] sm:$0xf]
    %v80 = vld [vmem:[%s78 + $0x4] sm:$0xf]
    %v81 = vld [vmem:[%s78 + $0x8] sm:$0xf]
    %v82 = vld [vmem:[%s78 + $0xc] sm:$0xf]
    %v83 = vld [vmem:[%s78 + $0x10] sm:$0xf]
    %v84 = vld [vmem:[%s78 + $0x14] sm:$0xf]
    %v85 = vld [vmem:[%s78 + $0x18] sm:$0xf]
    %v86 = vld [vmem:[%s78 + $0x1c] sm:$0xf]
    %v87 = vld [vmem:[%s78 + $0x20] sm:$0xf]
    %v88 = vld [vmem:[%s78 + $0x24] sm:$0xf]
    %v89 = vld [vmem:[%s78 + $0x28] sm:$0xf]
    %v90 = vld [vmem:[%s78 + $0x2c] sm:$0xf]
    %v91 = vld [vmem:[%s78 + $0x30] sm:$0xf]
    %v92 = vld [vmem:[%s78 + $0x34] sm:$0xf]
    %v93 = vld [vmem:[%s78 + $0x38] sm:$0xf]
    %v94 = vld [vmem:[%s78 + $0x3c] sm:$0xf]
    %v111 = vunpack.c.l.b16 %v79
    %v112 = vunpack.c.l.b16 %v80
    %v113 = vunpack.c.l.b16 %v81
    %v114 = vunpack.c.l.b16 %v82
    %v115 = vunpack.c.l.b16 %v83
    %v116 = vunpack.c.l.b16 %v84
    %v117 = vunpack.c.l.b16 %v85
    %v118 = vunpack.c.l.b16 %v86
    %v119 = vunpack.c.l.b16 %v87
    %v120 = vunpack.c.l.b16 %v88
    %v121 = vunpack.c.l.b16 %v89
    %v122 = vunpack.c.l.b16 %v90
    %v123 = vunpack.c.l.b16 %v91
    %v124 = vunpack.c.l.b16 %v92
    %v125 = vunpack.c.l.b16 %v93
    %v126 = vunpack.c.l.b16 %v94
    %v127 = vpack.c.b16 %v112, %v111
    %v128 = vpack.c.b16 %v114, %v113
    %v129 = vpack.c.b16 %v116, %v115
    %v130 = vpack.c.b16 %v118, %v117
    %v131 = vpack.c.b16 %v120, %v119
    %v132 = vpack.c.b16 %v122, %v121
    %v133 = vpack.c.b16 %v124, %v123
    %v134 = vpack.c.b16 %v126, %v125
    %143 = vmatprep.subr.bf16.mxu0 0
    %144 = vmatpush1.bf16.msra.mxu0 %v127
    %145 = vmatprep.subr.bf16.mxu0 0
    %146 = vmatpush1.bf16.msra.mxu0 %v128
    %147 = vmatprep.subr.bf16.mxu0 0
    %148 = vmatpush1.bf16.msra.mxu0 %v129
    %149 = vmatprep.subr.bf16.mxu0 0
    %150 = vmatpush1.bf16.msra.mxu0 %v130
    %151 = vmatprep.subr.bf16.mxu0 0
    %152 = vmatpush1.bf16.msra.mxu0 %v131
    %153 = vmatprep.subr.bf16.mxu0 0
    %154 = vmatpush1.bf16.msra.mxu0 %v132
    %155 = vmatprep.subr.bf16.mxu0 0
    %156 = vmatpush1.bf16.msra.mxu0 %v133
    %157 = vmatprep.subr.bf16.mxu0 0
    %158 = vmatpush1.bf16.msra.mxu0 %v134
    %159 = vmatprep.subr.bf16.mxu0 0
    %160 = vmatpush1.bf16.msra.mxu0 0
    %161 = vmatprep.subr.bf16.mxu0 0
    %162 = vmatpush1.bf16.msra.mxu0 0
    %163 = vmatprep.subr.bf16.mxu0 0
    %164 = vmatpush1.bf16.msra.mxu0 0
    %165 = vmatprep.subr.bf16.mxu0 0
    %166 = vmatpush1.bf16.msra.mxu0 0
    %167 = vmatprep.subr.bf16.mxu0 0
    %168 = vmatpush1.bf16.msra.mxu0 0
    %169 = vmatprep.subr.bf16.mxu0 0
    %170 = vmatpush1.bf16.msra.mxu0 0
    %171 = vmatprep.subr.bf16.mxu0 0
    %172 = vmatpush1.bf16.msra.mxu0 0
    %173 = vmatprep.subr.bf16.mxu0 0
    %174 = vmatpush1.bf16.msra.mxu0 0
    %175 = vmatprep.mubr.bf16.mxu0 0
    %176 = vmatmul.mubr.bf16.gmra.mrb[0].mxu0 %v77
    %v177 = vpop.f32.mrb[0].mxu0
    %v178 = vadd.f32 0.0, %v177
    %v179 = vpop.f32.mrb[0].mxu0
    %v180 = vpop.f32.mrb[0].mxu0
    %v181 = vadd.f32 0.0, %v180
    %v182 = vpop.f32.mrb[0].mxu0
    %183 = vdwg.mxu0
    %v200 = vunpack.c.l.b16 %v59
    %v201 = vunpack.c.l.b16 %v60
    %v202 = vunpack.c.l.b16 %v61
    %v203 = vunpack.c.l.b16 %v62
    %v204 = vunpack.c.l.b16 %v63
    %v205 = vunpack.c.l.b16 %v64
    %v206 = vunpack.c.l.b16 %v65
    %v207 = vunpack.c.l.b16 %v66
    %v208 = vunpack.c.l.b16 %v67
    %v209 = vunpack.c.l.b16 %v68
    %v210 = vunpack.c.l.b16 %v69
    %v211 = vunpack.c.l.b16 %v70
    %v212 = vunpack.c.l.b16 %v71
    %v213 = vunpack.c.l.b16 %v72
    %v214 = vunpack.c.l.b16 %v73
    %v215 = vunpack.c.l.b16 %v74
    %v216 = vpack.c.b16 %v201, %v200
    %v217 = vpack.c.b16 %v203, %v202
    %v218 = vpack.c.b16 %v205, %v204
    %v219 = vpack.c.b16 %v207, %v206
    %v220 = vpack.c.b16 %v209, %v208
    %v221 = vpack.c.b16 %v211, %v210
    %v222 = vpack.c.b16 %v213, %v212
    %v223 = vpack.c.b16 %v215, %v214
    %232 = vmatprep.subr.bf16.mxu0 0
    %233 = vmatpush1.bf16.msra.mxu0 %v216
    %234 = vmatprep.subr.bf16.mxu0 0
    %235 = vmatpush1.bf16.msra.mxu0 %v217
    %236 = vmatprep.subr.bf16.mxu0 0
    %237 = vmatpush1.bf16.msra.mxu0 %v218
    %238 = vmatprep.subr.bf16.mxu0 0
    %239 = vmatpush1.bf16.msra.mxu0 %v219
    %240 = vmatprep.subr.bf16.mxu0 0
    %241 = vmatpush1.bf16.msra.mxu0 %v220
    %242 = vmatprep.subr.bf16.mxu0 0
    %243 = vmatpush1.bf16.msra.mxu0 %v221
    %244 = vmatprep.subr.bf16.mxu0 0
    %245 = vmatpush1.bf16.msra.mxu0 %v222
    %246 = vmatprep.subr.bf16.mxu0 0
    %247 = vmatpush1.bf16.msra.mxu0 %v223
    %248 = vmatprep.subr.bf16.mxu0 0
    %249 = vmatpush1.bf16.msra.mxu0 0
    %250 = vmatprep.subr.bf16.mxu0 0
    %251 = vmatpush1.bf16.msra.mxu0 0
    %252 = vmatprep.subr.bf16.mxu0 0
    %253 = vmatpush1.bf16.msra.mxu0 0
    %254 = vmatprep.subr.bf16.mxu0 0
    %255 = vmatpush1.bf16.msra.mxu0 0
    %256 = vmatprep.subr.bf16.mxu0 0
    %257 = vmatpush1.bf16.msra.mxu0 0
    %258 = vmatprep.subr.bf16.mxu0 0
    %259 = vmatpush1.bf16.msra.mxu0 0
    %260 = vmatprep.subr.bf16.mxu0 0
    %261 = vmatpush1.bf16.msra.mxu0 0
    %262 = vmatprep.subr.bf16.mxu0 0
    %263 = vmatpush1.bf16.msra.mxu0 0
    %264 = vmatprep.mubr.bf16.mxu0 0
    %265 = vmatmul.mubr.bf16.gmra.mrb[0].mxu0 %v58
    %v266 = vpop.f32.mrb[0].mxu0
    %v267 = vadd.f32 %v178, %v266
    %v268 = vpop.f32.mrb[0].mxu0
    %v269 = vpop.f32.mrb[0].mxu0
    %v270 = vadd.f32 %v181, %v269
    %v271 = vpop.f32.mrb[0].mxu0
    %272 = vdwg.mxu0
    %v273 = vld [vmem:[#allocation2 + $0x2] sm:$0xff]
    %v274 = vld [vmem:[#allocation2 + $0xa] sm:$0xff]
    %v275 = vpack.c.bf16 %v274, %v273
    %s276 = scalar_lea.vmem %s1, 128
    %v277 = vld [vmem:[%s276] sm:$0xf]
    %v278 = vld [vmem:[%s276 + $0x4] sm:$0xf]
    %v279 = vld [vmem:[%s276 + $0x8] sm:$0xf]
    %v280 = vld [vmem:[%s276 + $0xc] sm:$0xf]
    %v281 = vld [vmem:[%s276 + $0x10] sm:$0xf]
    %v282 = vld [vmem:[%s276 + $0x14] sm:$0xf]
    %v283 = vld [vmem:[%s276 + $0x18] sm:$0xf]
    %v284 = vld [vmem:[%s276 + $0x1c] sm:$0xf]
    %v285 = vld [vmem:[%s276 + $0x20] sm:$0xf]
    %v286 = vld [vmem:[%s276 + $0x24] sm:$0xf]
    %v287 = vld [vmem:[%s276 + $0x28] sm:$0xf]
    %v288 = vld [vmem:[%s276 + $0x2c] sm:$0xf]
    %v289 = vld [vmem:[%s276 + $0x30] sm:$0xf]
    %v290 = vld [vmem:[%s276 + $0x34] sm:$0xf]
    %v291 = vld [vmem:[%s276 + $0x38] sm:$0xf]
    %v292 = vld [vmem:[%s276 + $0x3c] sm:$0xf]
    %v309 = vunpack.c.l.b16 %v277
    %v310 = vunpack.c.l.b16 %v278
    %v311 = vunpack.c.l.b16 %v279
    %v312 = vunpack.c.l.b16 %v280
    %v313 = vunpack.c.l.b16 %v281
    %v314 = vunpack.c.l.b16 %v282
    %v315 = vunpack.c.l.b16 %v283
    %v316 = vunpack.c.l.b16 %v284
    %v317 = vunpack.c.l.b16 %v285
    %v318 = vunpack.c.l.b16 %v286
    %v319 = vunpack.c.l.b16 %v287
    %v320 = vunpack.c.l.b16 %v288
    %v321 = vunpack.c.l.b16 %v289
    %v322 = vunpack.c.l.b16 %v290
    %v323 = vunpack.c.l.b16 %v291
    %v324 = vunpack.c.l.b16 %v292
    %v325 = vpack.c.b16 %v310, %v309
    %v326 = vpack.c.b16 %v312, %v311
    %v327 = vpack.c.b16 %v314, %v313
    %v328 = vpack.c.b16 %v316, %v315
    %v329 = vpack.c.b16 %v318, %v317
    %v330 = vpack.c.b16 %v320, %v319
    %v331 = vpack.c.b16 %v322, %v321
    %v332 = vpack.c.b16 %v324, %v323
    %341 = vmatprep.subr.bf16.mxu0 0
    %342 = vmatpush1.bf16.msra.mxu0 %v325
    %343 = vmatprep.subr.bf16.mxu0 0
    %344 = vmatpush1.bf16.msra.mxu0 %v326
    %345 = vmatprep.subr.bf16.mxu0 0
    %346 = vmatpush1.bf16.msra.mxu0 %v327
    %347 = vmatprep.subr.bf16.mxu0 0
    %348 = vmatpush1.bf16.msra.mxu0 %v328
    %349 = vmatprep.subr.bf16.mxu0 0
    %350 = vmatpush1.bf16.msra.mxu0 %v329
    %351 = vmatprep.subr.bf16.mxu0 0
    %352 = vmatpush1.bf16.msra.mxu0 %v330
    %353 = vmatprep.subr.bf16.mxu0 0
    %354 = vmatpush1.bf16.msra.mxu0 %v331
    %355 = vmatprep.subr.bf16.mxu0 0
    %356 = vmatpush1.bf16.msra.mxu0 %v332
    %357 = vmatprep.subr.bf16.mxu0 0
    %358 = vmatpush1.bf16.msra.mxu0 0
    %359 = vmatprep.subr.bf16.mxu0 0
    %360 = vmatpush1.bf16.msra.mxu0 0
    %361 = vmatprep.subr.bf16.mxu0 0
    %362 = vmatpush1.bf16.msra.mxu0 0
    %363 = vmatprep.subr.bf16.mxu0 0
    %364 = vmatpush1.bf16.msra.mxu0 0
    %365 = vmatprep.subr.bf16.mxu0 0
    %366 = vmatpush1.bf16.msra.mxu0 0
    %367 = vmatprep.subr.bf16.mxu0 0
    %368 = vmatpush1.bf16.msra.mxu0 0
    %369 = vmatprep.subr.bf16.mxu0 0
    %370 = vmatpush1.bf16.msra.mxu0 0
    %371 = vmatprep.subr.bf16.mxu0 0
    %372 = vmatpush1.bf16.msra.mxu0 0
    %373 = vmatprep.mubr.bf16.mxu0 0
    %374 = vmatmul.mubr.bf16.gmra.mrb[0].mxu0 %v275
    %v375 = vpop.f32.mrb[0].mxu0
    %v376 = vadd.f32 0.0, %v375
    %v377 = vpop.f32.mrb[0].mxu0
    %v378 = vpop.f32.mrb[0].mxu0
    %v379 = vadd.f32 0.0, %v378
    %v380 = vpop.f32.mrb[0].mxu0
    %381 = vdwg.mxu0
    %v382 = vadd.f32 %v267, %v376
    %v383 = vadd.f32 %v270, %v379
    %v385 = vlaneseq
    %v386 = vshrl.u32 %v385, 7
    %v387 = vsub.s32 0, %v386
    %v388 = vrot.slane %v49, %v387
    %v390 = vadd.f32 %v382, %v388
    %v391 = vadd.f32 %v383, %v388
    %v393 = vlaneseq
    %v394 = vshrl.u32 %v393, 7
    %v395 = vsub.s32 0, %v394
    %v396 = vrot.slane %v50, %v395
    %v398 = vmul.f32 %v390, %v396
    %v399 = vmul.f32 %v391, %v396
    %v401 = vlaneseq
    %v402 = vshrl.u32 %v401, 7
    %v403 = vsub.s32 0, %v402
    %v404 = vrot.slane %v51, %v403
    %v406 = vadd.f32 %v398, %v404
    %v407 = vadd.f32 %v399, %v404
    %v408 = vmax.f32 %v406, 0.0
    %v409 = vmax.f32 %v407, 0.0
    %410 = vst [vmem:[#allocation2 + $0x1] sm:$0xff] %v408
    %411 = vst [vmem:[#allocation2 + $0x9] sm:$0xff] %v409
    %v412 = vld [vmem:[#allocation2] sm:$0xff]
    %v413 = vld [vmem:[#allocation2 + $0x8] sm:$0xff]
    %v414 = vpack.c.bf16 %v413, %v412
    %v415 = vld [vmem:[%s1] sm:$0xf]
    %v416 = vld [vmem:[%s1 + $0x4] sm:$0xf]
    %v417 = vld [vmem:[%s1 + $0x8] sm:$0xf]
    %v418 = vld [vmem:[%s1 + $0xc] sm:$0xf]
    %v419 = vld [vmem:[%s1 + $0x10] sm:$0xf]
    %v420 = vld [vmem:[%s1 + $0x14] sm:$0xf]
    %v421 = vld [vmem:[%s1 + $0x18] sm:$0xf]
    %v422 = vld [vmem:[%s1 + $0x1c] sm:$0xf]
    %v423 = vld [vmem:[%s1 + $0x20] sm:$0xf]
    %v424 = vld [vmem:[%s1 + $0x24] sm:$0xf]
    %v425 = vld [vmem:[%s1 + $0x28] sm:$0xf]
    %v426 = vld [vmem:[%s1 + $0x2c] sm:$0xf]
    %v427 = vld [vmem:[%s1 + $0x30] sm:$0xf]
    %v428 = vld [vmem:[%s1 + $0x34] sm:$0xf]
    %v429 = vld [vmem:[%s1 + $0x38] sm:$0xf]
    %v430 = vld [vmem:[%s1 + $0x3c] sm:$0xf]
    %v431 = vld [vmem:[#allocation2 + $0x1] sm:$0xff]
    %v432 = vld [vmem:[#allocation2 + $0x9] sm:$0xff]
    %v433 = vpack.c.bf16 %v432, %v431
    %v434 = vld [vmem:[%s78] sm:$0xf]
    %v435 = vld [vmem:[%s78 + $0x4] sm:$0xf]
    %v436 = vld [vmem:[%s78 + $0x8] sm:$0xf]
    %v437 = vld [vmem:[%s78 + $0xc] sm:$0xf]
    %v438 = vld [vmem:[%s78 + $0x10] sm:$0xf]
    %v439 = vld [vmem:[%s78 + $0x14] sm:$0xf]
    %v440 = vld [vmem:[%s78 + $0x18] sm:$0xf]
    %v441 = vld [vmem:[%s78 + $0x1c] sm:$0xf]
    %v442 = vld [vmem:[%s78 + $0x20] sm:$0xf]
    %v443 = vld [vmem:[%s78 + $0x24] sm:$0xf]
    %v444 = vld [vmem:[%s78 + $0x28] sm:$0xf]
    %v445 = vld [vmem:[%s78 + $0x2c] sm:$0xf]
    %v446 = vld [vmem:[%s78 + $0x30] sm:$0xf]
    %v447 = vld [vmem:[%s78 + $0x34] sm:$0xf]
    %v448 = vld [vmem:[%s78 + $0x38] sm:$0xf]
    %v449 = vld [vmem:[%s78 + $0x3c] sm:$0xf]
    %v466 = vunpack.c.l.b16 %v434
    %v467 = vunpack.c.l.b16 %v435
    %v468 = vunpack.c.l.b16 %v436
    %v469 = vunpack.c.l.b16 %v437
    %v470 = vunpack.c.l.b16 %v438
    %v471 = vunpack.c.l.b16 %v439
    %v472 = vunpack.c.l.b16 %v440
    %v473 = vunpack.c.l.b16 %v441
    %v474 = vunpack.c.l.b16 %v442
    %v475 = vunpack.c.l.b16 %v443
    %v476 = vunpack.c.l.b16 %v444
    %v477 = vunpack.c.l.b16 %v445
    %v478 = vunpack.c.l.b16 %v446
    %v479 = vunpack.c.l.b16 %v447
    %v480 = vunpack.c.l.b16 %v448
    %v481 = vunpack.c.l.b16 %v449
    %v482 = vpack.c.b16 %v467, %v466
    %v483 = vpack.c.b16 %v469, %v468
    %v484 = vpack.c.b16 %v471, %v470
    %v485 = vpack.c.b16 %v473, %v472
    %v486 = vpack.c.b16 %v475, %v474
    %v487 = vpack.c.b16 %v477, %v476
    %v488 = vpack.c.b16 %v479, %v478
    %v489 = vpack.c.b16 %v481, %v480
    %498 = vmatprep.subr.bf16.mxu0 0
    %499 = vmatpush1.bf16.msra.mxu0 %v482
    %500 = vmatprep.subr.bf16.mxu0 0
    %501 = vmatpush1.bf16.msra.mxu0 %v483
    %502 = vmatprep.subr.bf16.mxu0 0
    %503 = vmatpush1.bf16.msra.mxu0 %v484
    %504 = vmatprep.subr.bf16.mxu0 0
    %505 = vmatpush1.bf16.msra.mxu0 %v485
    %506 = vmatprep.subr.bf16.mxu0 0
    %507 = vmatpush1.bf16.msra.mxu0 %v486
    %508 = vmatprep.subr.bf16.mxu0 0
    %509 = vmatpush1.bf16.msra.mxu0 %v487
    %510 = vmatprep.subr.bf16.mxu0 0
    %511 = vmatpush1.bf16.msra.mxu0 %v488
    %512 = vmatprep.subr.bf16.mxu0 0
    %513 = vmatpush1.bf16.msra.mxu0 %v489
    %514 = vmatprep.subr.bf16.mxu0 0
    %515 = vmatpush1.bf16.msra.mxu0 0
    %516 = vmatprep.subr.bf16.mxu0 0
    %517 = vmatpush1.bf16.msra.mxu0 0
    %518 = vmatprep.subr.bf16.mxu0 0
    %519 = vmatpush1.bf16.msra.mxu0 0
    %520 = vmatprep.subr.bf16.mxu0 0
    %521 = vmatpush1.bf16.msra.mxu0 0
    %522 = vmatprep.subr.bf16.mxu0 0
    %523 = vmatpush1.bf16.msra.mxu0 0
    %524 = vmatprep.subr.bf16.mxu0 0
    %525 = vmatpush1.bf16.msra.mxu0 0
    %526 = vmatprep.subr.bf16.mxu0 0
    %527 = vmatpush1.bf16.msra.mxu0 0
    %528 = vmatprep.subr.bf16.mxu0 0
    %529 = vmatpush1.bf16.msra.mxu0 0
    %530 = vmatprep.mubr.bf16.mxu0 0
    %531 = vmatmul.mubr.bf16.gmra.mrb[0].mxu0 %v433
    %v532 = vpop.f32.mrb[0].mxu0
    %v533 = vadd.f32 0.0, %v532
    %v534 = vpop.f32.mrb[0].mxu0
    %v535 = vpop.f32.mrb[0].mxu0
    %v536 = vadd.f32 0.0, %v535
    %v537 = vpop.f32.mrb[0].mxu0
    %538 = vdwg.mxu0
    %v555 = vunpack.c.l.b16 %v415
    %v556 = vunpack.c.l.b16 %v416
    %v557 = vunpack.c.l.b16 %v417
    %v558 = vunpack.c.l.b16 %v418
    %v559 = vunpack.c.l.b16 %v419
    %v560 = vunpack.c.l.b16 %v420
    %v561 = vunpack.c.l.b16 %v421
    %v562 = vunpack.c.l.b16 %v422
    %v563 = vunpack.c.l.b16 %v423
    %v564 = vunpack.c.l.b16 %v424
    %v565 = vunpack.c.l.b16 %v425
    %v566 = vunpack.c.l.b16 %v426
    %v567 = vunpack.c.l.b16 %v427
    %v568 = vunpack.c.l.b16 %v428
    %v569 = vunpack.c.l.b16 %v429
    %v570 = vunpack.c.l.b16 %v430
    %v571 = vpack.c.b16 %v556, %v555
    %v572 = vpack.c.b16 %v558, %v557
    %v573 = vpack.c.b16 %v560, %v559
    %v574 = vpack.c.b16 %v562, %v561
    %v575 = vpack.c.b16 %v564, %v563
    %v576 = vpack.c.b16 %v566, %v565
    %v577 = vpack.c.b16 %v568, %v567
    %v578 = vpack.c.b16 %v570, %v569
    %587 = vmatprep.subr.bf16.mxu0 0
    %588 = vmatpush1.bf16.msra.mxu0 %v571
    %589 = vmatprep.subr.bf16.mxu0 0
    %590 = vmatpush1.bf16.msra.mxu0 %v572
    %591 = vmatprep.subr.bf16.mxu0 0
    %592 = vmatpush1.bf16.msra.mxu0 %v573
    %593 = vmatprep.subr.bf16.mxu0 0
    %594 = vmatpush1.bf16.msra.mxu0 %v574
    %595 = vmatprep.subr.bf16.mxu0 0
    %596 = vmatpush1.bf16.msra.mxu0 %v575
    %597 = vmatprep.subr.bf16.mxu0 0
    %598 = vmatpush1.bf16.msra.mxu0 %v576
    %599 = vmatprep.subr.bf16.mxu0 0
    %600 = vmatpush1.bf16.msra.mxu0 %v577
    %601 = vmatprep.subr.bf16.mxu0 0
    %602 = vmatpush1.bf16.msra.mxu0 %v578
    %603 = vmatprep.subr.bf16.mxu0 0
    %604 = vmatpush1.bf16.msra.mxu0 0
    %605 = vmatprep.subr.bf16.mxu0 0
    %606 = vmatpush1.bf16.msra.mxu0 0
    %607 = vmatprep.subr.bf16.mxu0 0
    %608 = vmatpush1.bf16.msra.mxu0 0
    %609 = vmatprep.subr.bf16.mxu0 0
    %610 = vmatpush1.bf16.msra.mxu0 0
    %611 = vmatprep.subr.bf16.mxu0 0
    %612 = vmatpush1.bf16.msra.mxu0 0
    %613 = vmatprep.subr.bf16.mxu0 0
    %614 = vmatpush1.bf16.msra.mxu0 0
    %615 = vmatprep.subr.bf16.mxu0 0
    %616 = vmatpush1.bf16.msra.mxu0 0
    %617 = vmatprep.subr.bf16.mxu0 0
    %618 = vmatpush1.bf16.msra.mxu0 0
    %619 = vmatprep.mubr.bf16.mxu0 0
    %620 = vmatmul.mubr.bf16.gmra.mrb[0].mxu0 %v414
    %v621 = vpop.f32.mrb[0].mxu0
    %v622 = vadd.f32 %v533, %v621
    %v623 = vpop.f32.mrb[0].mxu0
    %v624 = vpop.f32.mrb[0].mxu0
    %v625 = vadd.f32 %v536, %v624
    %v626 = vpop.f32.mrb[0].mxu0
    %627 = vdwg.mxu0
    %v628 = vld [vmem:[#allocation2 + $0x2] sm:$0xff]
    %v629 = vld [vmem:[#allocation2 + $0xa] sm:$0xff]
    %v630 = vpack.c.bf16 %v629, %v628
    %v631 = vld [vmem:[%s276] sm:$0xf]
    %v632 = vld [vmem:[%s276 + $0x4] sm:$0xf]
    %v633 = vld [vmem:[%s276 + $0x8] sm:$0xf]
    %v634 = vld [vmem:[%s276 + $0xc] sm:$0xf]
    %v635 = vld [vmem:[%s276 + $0x10] sm:$0xf]
    %v636 = vld [vmem:[%s276 + $0x14] sm:$0xf]
    %v637 = vld [vmem:[%s276 + $0x18] sm:$0xf]
    %v638 = vld [vmem:[%s276 + $0x1c] sm:$0xf]
    %v639 = vld [vmem:[%s276 + $0x20] sm:$0xf]
    %v640 = vld [vmem:[%s276 + $0x24] sm:$0xf]
    %v641 = vld [vmem:[%s276 + $0x28] sm:$0xf]
    %v642 = vld [vmem:[%s276 + $0x2c] sm:$0xf]
    %v643 = vld [vmem:[%s276 + $0x30] sm:$0xf]
    %v644 = vld [vmem:[%s276 + $0x34] sm:$0xf]
    %v645 = vld [vmem:[%s276 + $0x38] sm:$0xf]
    %v646 = vld [vmem:[%s276 + $0x3c] sm:$0xf]
    %v663 = vunpack.c.l.b16 %v631
    %v664 = vunpack.c.l.b16 %v632
    %v665 = vunpack.c.l.b16 %v633
    %v666 = vunpack.c.l.b16 %v634
    %v667 = vunpack.c.l.b16 %v635
    %v668 = vunpack.c.l.b16 %v636
    %v669 = vunpack.c.l.b16 %v637
    %v670 = vunpack.c.l.b16 %v638
    %v671 = vunpack.c.l.b16 %v639
    %v672 = vunpack.c.l.b16 %v640
    %v673 = vunpack.c.l.b16 %v641
    %v674 = vunpack.c.l.b16 %v642
    %v675 = vunpack.c.l.b16 %v643
    %v676 = vunpack.c.l.b16 %v644
    %v677 = vunpack.c.l.b16 %v645
    %v678 = vunpack.c.l.b16 %v646
    %v679 = vpack.c.b16 %v664, %v663
    %v680 = vpack.c.b16 %v666, %v665
    %v681 = vpack.c.b16 %v668, %v667
    %v682 = vpack.c.b16 %v670, %v669
    %v683 = vpack.c.b16 %v672, %v671
    %v684 = vpack.c.b16 %v674, %v673
    %v685 = vpack.c.b16 %v676, %v675
    %v686 = vpack.c.b16 %v678, %v677
    %695 = vmatprep.subr.bf16.mxu0 0
    %696 = vmatpush1.bf16.msra.mxu0 %v679
    %697 = vmatprep.subr.bf16.mxu0 0
    %698 = vmatpush1.bf16.msra.mxu0 %v680
    %699 = vmatprep.subr.bf16.mxu0 0
    %700 = vmatpush1.bf16.msra.mxu0 %v681
    %701 = vmatprep.subr.bf16.mxu0 0
    %702 = vmatpush1.bf16.msra.mxu0 %v682
    %703 = vmatprep.subr.bf16.mxu0 0
    %704 = vmatpush1.bf16.msra.mxu0 %v683
    %705 = vmatprep.subr.bf16.mxu0 0
    %706 = vmatpush1.bf16.msra.mxu0 %v684
    %707 = vmatprep.subr.bf16.mxu0 0
    %708 = vmatpush1.bf16.msra.mxu0 %v685
    %709 = vmatprep.subr.bf16.mxu0 0
    %710 = vmatpush1.bf16.msra.mxu0 %v686
    %711 = vmatprep.subr.bf16.mxu0 0
    %712 = vmatpush1.bf16.msra.mxu0 0
    %713 = vmatprep.subr.bf16.mxu0 0
    %714 = vmatpush1.bf16.msra.mxu0 0
    %715 = vmatprep.subr.bf16.mxu0 0
    %716 = vmatpush1.bf16.msra.mxu0 0
    %717 = vmatprep.subr.bf16.mxu0 0
    %718 = vmatpush1.bf16.msra.mxu0 0
    %719 = vmatprep.subr.bf16.mxu0 0
    %720 = vmatpush1.bf16.msra.mxu0 0
    %721 = vmatprep.subr.bf16.mxu0 0
    %722 = vmatpush1.bf16.msra.mxu0 0
    %723 = vmatprep.subr.bf16.mxu0 0
    %724 = vmatpush1.bf16.msra.mxu0 0
    %725 = vmatprep.subr.bf16.mxu0 0
    %726 = vmatpush1.bf16.msra.mxu0 0
    %727 = vmatprep.mubr.bf16.mxu0 0
    %728 = vmatmul.mubr.bf16.gmra.mrb[0].mxu0 %v630
    %v729 = vpop.f32.mrb[0].mxu0
    %v730 = vadd.f32 0.0, %v729
    %v731 = vpop.f32.mrb[0].mxu0
    %v732 = vpop.f32.mrb[0].mxu0
    %v733 = vadd.f32 0.0, %v732
    %v734 = vpop.f32.mrb[0].mxu0
    %735 = vdwg.mxu0
    %v736 = vadd.f32 %v622, %v730
    %v737 = vadd.f32 %v625, %v733
    %v738 = vadd.f32 %v736, %v388
    %v739 = vadd.f32 %v737, %v388
    %v740 = vmul.f32 %v738, %v396
    %v741 = vmul.f32 %v739, %v396
    %v742 = vadd.f32 %v740, %v404
    %v743 = vadd.f32 %v741, %v404
    %v744 = vmax.f32 %v742, 0.0
    %v745 = vmax.f32 %v743, 0.0
    %vm748 = vcmask 1046528
    %v749 = vrot.slane %v744, 1
    %v750 = vrot.slane %v745, 1
    %v751 = vsel %vm748, %v749, %v750
    %v754 = vmax.f32 %v744, %v751
    %v755 = vmax.f32 %v745, %v750
    %756 = vrot.lane.b32.xlu0 %v754, 124
    %v757 = vpop.permute.xlu0 %756
    %758 = vrot.lane.b32.xlu0 %v755, 124
    %v759 = vpop.permute.xlu0 %758
    %v760 = vmax.f32 %v754, %v757
    %v761 = vmax.f32 %v755, %v759
    %v763 = vrot.slane %v760, 2
    %v765 = vrot.slane %v760, 4
    %v767 = vrot.slane %v760, 6
    %v770 = vrot.slane %v761, 2
    %v772 = vrot.slane %v761, 4
    %v774 = vrot.slane %v761, 6
    %v776 = vpack.c.bf16 %v760, %v760
    %v777 = vpack.c.bf16 %v763, %v763
    %v778 = vpack.c.bf16 %v765, %v765
    %v779 = vpack.c.bf16 %v767, %v767
    %v780 = vpack.c.bf16 %v761, %v761
    %v781 = vpack.c.bf16 %v770, %v770
    %v782 = vpack.c.bf16 %v772, %v772
    %v783 = vpack.c.bf16 %v774, %v774
    %v784 = vld [vmem:[#allocation3] sm:$0xff]
    %v785 = vld [vmem:[#allocation3 + $0x8] sm:$0xff]
    %v786 = vld [vmem:[#allocation3 + $0x10] sm:$0xff]
    %v787 = vld [vmem:[#allocation3 + $0x18] sm:$0xff]
    %v788 = vld [vmem:[#allocation3 + $0x20] sm:$0xff]
    %v789 = vld [vmem:[#allocation3 + $0x28] sm:$0xff]
    %v790 = vld [vmem:[#allocation3 + $0x30] sm:$0xff]
    %v791 = vld [vmem:[#allocation3 + $0x38] sm:$0xff]
    %v792 = vld [vmem:[#allocation3 + $0x40] sm:$0xff]
    %v793 = vld [vmem:[#allocation3 + $0x48] sm:$0xff]
    %v794 = vld [vmem:[#allocation3 + $0x50] sm:$0xff]
    %v795 = vld [vmem:[#allocation3 + $0x58] sm:$0xff]
    %v796 = vld [vmem:[#allocation3 + $0x60] sm:$0xff]
    %v797 = vld [vmem:[#allocation3 + $0x68] sm:$0xff]
    %v798 = vld [vmem:[#allocation3 + $0x70] sm:$0xff]
    %v799 = vld [vmem:[#allocation3 + $0x78] sm:$0xff]
    %v800 = vld [vmem:[#allocation3 + $0x80] sm:$0xff]
    %v801 = vld [vmem:[#allocation3 + $0x88] sm:$0xff]
    %v802 = vld [vmem:[#allocation3 + $0x90] sm:$0xff]
    %v803 = vld [vmem:[#allocation3 + $0x98] sm:$0xff]
    %v804 = vld [vmem:[#allocation3 + $0xa0] sm:$0xff]
    %v805 = vld [vmem:[#allocation3 + $0xa8] sm:$0xff]
    %v806 = vld [vmem:[#allocation3 + $0xb0] sm:$0xff]
    %v807 = vld [vmem:[#allocation3 + $0xb8] sm:$0xff]
    %v808 = vld [vmem:[#allocation3 + $0xc0] sm:$0xff]
    %v809 = vld [vmem:[#allocation3 + $0xc8] sm:$0xff]
    %v810 = vld [vmem:[#allocation3 + $0xd0] sm:$0xff]
    %v811 = vld [vmem:[#allocation3 + $0xd8] sm:$0xff]
    %v812 = vld [vmem:[#allocation3 + $0xe0] sm:$0xff]
    %v813 = vld [vmem:[#allocation3 + $0xe8] sm:$0xff]
    %v814 = vld [vmem:[#allocation3 + $0xf0] sm:$0xff]
    %v815 = vld [vmem:[#allocation3 + $0xf8] sm:$0xff]
    %v816 = vld [vmem:[#allocation3 + $0x100] sm:$0xff]
    %v817 = vld [vmem:[#allocation3 + $0x108] sm:$0xff]
    %v818 = vld [vmem:[#allocation3 + $0x110] sm:$0xff]
    %v819 = vld [vmem:[#allocation3 + $0x118] sm:$0xff]
    %v820 = vld [vmem:[#allocation3 + $0x120] sm:$0xff]
    %v821 = vld [vmem:[#allocation3 + $0x128] sm:$0xff]
    %v822 = vld [vmem:[#allocation3 + $0x130] sm:$0xff]
    %v823 = vld [vmem:[#allocation3 + $0x138] sm:$0xff]
    %v824 = vld [vmem:[#allocation3 + $0x140] sm:$0xff]
    %v825 = vld [vmem:[#allocation3 + $0x148] sm:$0xff]
    %v826 = vld [vmem:[#allocation3 + $0x150] sm:$0xff]
    %v827 = vld [vmem:[#allocation3 + $0x158] sm:$0xff]
    %v828 = vld [vmem:[#allocation3 + $0x160] sm:$0xff]
    %v829 = vld [vmem:[#allocation3 + $0x168] sm:$0xff]
    %v830 = vld [vmem:[#allocation3 + $0x170] sm:$0xff]
    %v831 = vld [vmem:[#allocation3 + $0x178] sm:$0xff]
    %v832 = vld [vmem:[#allocation3 + $0x180] sm:$0xff]
    %v833 = vld [vmem:[#allocation3 + $0x188] sm:$0xff]
    %v834 = vld [vmem:[#allocation3 + $0x190] sm:$0xff]
    %v835 = vld [vmem:[#allocation3 + $0x198] sm:$0xff]
    %v836 = vld [vmem:[#allocation3 + $0x1a0] sm:$0xff]
    %v837 = vld [vmem:[#allocation3 + $0x1a8] sm:$0xff]
    %v838 = vld [vmem:[#allocation3 + $0x1b0] sm:$0xff]
    %v839 = vld [vmem:[#allocation3 + $0x1b8] sm:$0xff]
    %v840 = vld [vmem:[#allocation3 + $0x1c0] sm:$0xff]
    %v841 = vld [vmem:[#allocation3 + $0x1c8] sm:$0xff]
    %v842 = vld [vmem:[#allocation3 + $0x1d0] sm:$0xff]
    %v843 = vld [vmem:[#allocation3 + $0x1d8] sm:$0xff]
    %v844 = vld [vmem:[#allocation3 + $0x1e0] sm:$0xff]
    %v845 = vld [vmem:[#allocation3 + $0x1e8] sm:$0xff]
    %v846 = vld [vmem:[#allocation3 + $0x1f0] sm:$0xff]
    %v847 = vld [vmem:[#allocation3 + $0x1f8] sm:$0xff]
    %v848 = vld [vmem:[#allocation3 + $0x200] sm:$0xff]
    %v849 = vld [vmem:[#allocation3 + $0x208] sm:$0xff]
    %v850 = vld [vmem:[#allocation3 + $0x210] sm:$0xff]
    %v851 = vld [vmem:[#allocation3 + $0x218] sm:$0xff]
    %v852 = vld [vmem:[#allocation3 + $0x220] sm:$0xff]
    %v853 = vld [vmem:[#allocation3 + $0x228] sm:$0xff]
    %v854 = vld [vmem:[#allocation3 + $0x230] sm:$0xff]
    %v855 = vld [vmem:[#allocation3 + $0x238] sm:$0xff]
    %v856 = vld [vmem:[#allocation3 + $0x240] sm:$0xff]
    %v857 = vld [vmem:[#allocation3 + $0x248] sm:$0xff]
    %v858 = vld [vmem:[#allocation3 + $0x250] sm:$0xff]
    %v859 = vld [vmem:[#allocation3 + $0x258] sm:$0xff]
    %v860 = vld [vmem:[#allocation3 + $0x260] sm:$0xff]
    %v861 = vld [vmem:[#allocation3 + $0x268] sm:$0xff]
    %v862 = vld [vmem:[#allocation3 + $0x270] sm:$0xff]
    %v863 = vld [vmem:[#allocation3 + $0x278] sm:$0xff]
    %v864 = vld [vmem:[#allocation3 + $0x280] sm:$0xff]
    %v865 = vld [vmem:[#allocation3 + $0x288] sm:$0xff]
    %v866 = vld [vmem:[#allocation3 + $0x290] sm:$0xff]
    %v867 = vld [vmem:[#allocation3 + $0x298] sm:$0xff]
    %v868 = vld [vmem:[#allocation3 + $0x2a0] sm:$0xff]
    %v869 = vld [vmem:[#allocation3 + $0x2a8] sm:$0xff]
    %v870 = vld [vmem:[#allocation3 + $0x2b0] sm:$0xff]
    %v871 = vld [vmem:[#allocation3 + $0x2b8] sm:$0xff]
    %v872 = vld [vmem:[#allocation3 + $0x2c0] sm:$0xff]
    %v873 = vld [vmem:[#allocation3 + $0x2c8] sm:$0xff]
    %v874 = vld [vmem:[#allocation3 + $0x2d0] sm:$0xff]
    %v875 = vld [vmem:[#allocation3 + $0x2d8] sm:$0xff]
    %v876 = vld [vmem:[#allocation3 + $0x2e0] sm:$0xff]
    %v877 = vld [vmem:[#allocation3 + $0x2e8] sm:$0xff]
    %v878 = vld [vmem:[#allocation3 + $0x2f0] sm:$0xff]
    %v879 = vld [vmem:[#allocation3 + $0x2f8] sm:$0xff]
    %v880 = vld [vmem:[#allocation3 + $0x300] sm:$0xff]
    %v881 = vld [vmem:[#allocation3 + $0x308] sm:$0xff]
    %v882 = vld [vmem:[#allocation3 + $0x310] sm:$0xff]
    %v883 = vld [vmem:[#allocation3 + $0x318] sm:$0xff]
    %v884 = vld [vmem:[#allocation3 + $0x320] sm:$0xff]
    %v885 = vld [vmem:[#allocation3 + $0x328] sm:$0xff]
    %v886 = vld [vmem:[#allocation3 + $0x330] sm:$0xff]
    %v887 = vld [vmem:[#allocation3 + $0x338] sm:$0xff]
    %v888 = vld [vmem:[#allocation3 + $0x340] sm:$0xff]
    %v889 = vld [vmem:[#allocation3 + $0x348] sm:$0xff]
    %v890 = vld [vmem:[#allocation3 + $0x350] sm:$0xff]
    %v891 = vld [vmem:[#allocation3 + $0x358] sm:$0xff]
    %v892 = vld [vmem:[#allocation3 + $0x360] sm:$0xff]
    %v893 = vld [vmem:[#allocation3 + $0x368] sm:$0xff]
    %v894 = vld [vmem:[#allocation3 + $0x370] sm:$0xff]
    %v895 = vld [vmem:[#allocation3 + $0x378] sm:$0xff]
    %v896 = vld [vmem:[#allocation3 + $0x380] sm:$0xff]
    %v897 = vld [vmem:[#allocation3 + $0x388] sm:$0xff]
    %v898 = vld [vmem:[#allocation3 + $0x390] sm:$0xff]
    %v899 = vld [vmem:[#allocation3 + $0x398] sm:$0xff]
    %v900 = vld [vmem:[#allocation3 + $0x3a0] sm:$0xff]
    %v901 = vld [vmem:[#allocation3 + $0x3a8] sm:$0xff]
    %v902 = vld [vmem:[#allocation3 + $0x3b0] sm:$0xff]
    %v903 = vld [vmem:[#allocation3 + $0x3b8] sm:$0xff]
    %v904 = vld [vmem:[#allocation3 + $0x3c0] sm:$0xff]
    %v905 = vld [vmem:[#allocation3 + $0x3c8] sm:$0xff]
    %v906 = vld [vmem:[#allocation3 + $0x3d0] sm:$0xff]
    %v907 = vld [vmem:[#allocation3 + $0x3d8] sm:$0xff]
    %v908 = vld [vmem:[#allocation3 + $0x3e0] sm:$0xff]
    %v909 = vld [vmem:[#allocation3 + $0x3e8] sm:$0xff]
    %v910 = vld [vmem:[#allocation3 + $0x3f0] sm:$0xff]
    %v911 = vld [vmem:[#allocation3 + $0x3f8] sm:$0xff]
    %v912 = vld [vmem:[%s6] sm:$0x3]
    %v1041 = vunpack.c.l.b16 %v784
    %v1042 = vunpack.c.h.b16 %v784
    %v1043 = vunpack.c.l.b16 %v785
    %v1044 = vunpack.c.h.b16 %v785
    %v1045 = vunpack.c.l.b16 %v786
    %v1046 = vunpack.c.h.b16 %v786
    %v1047 = vunpack.c.l.b16 %v787
    %v1048 = vunpack.c.h.b16 %v787
    %v1049 = vunpack.c.l.b16 %v788
    %v1050 = vunpack.c.h.b16 %v788
    %v1051 = vunpack.c.l.b16 %v789
    %v1052 = vunpack.c.h.b16 %v789
    %v1053 = vunpack.c.l.b16 %v790
    %v1054 = vunpack.c.h.b16 %v790
    %v1055 = vunpack.c.l.b16 %v791
    %v1056 = vunpack.c.h.b16 %v791
    %v1057 = vunpack.c.l.b16 %v792
    %v1058 = vunpack.c.h.b16 %v792
    %v1059 = vunpack.c.l.b16 %v793
    %v1060 = vunpack.c.h.b16 %v793
    %v1061 = vunpack.c.l.b16 %v794
    %v1062 = vunpack.c.h.b16 %v794
    %v1063 = vunpack.c.l.b16 %v795
    %v1064 = vunpack.c.h.b16 %v795
    %v1065 = vunpack.c.l.b16 %v796
    %v1066 = vunpack.c.h.b16 %v796
    %v1067 = vunpack.c.l.b16 %v797
    %v1068 = vunpack.c.h.b16 %v797
    %v1069 = vunpack.c.l.b16 %v798
    %v1070 = vunpack.c.h.b16 %v798
    %v1071 = vunpack.c.l.b16 %v799
    %v1072 = vunpack.c.h.b16 %v799
    %v1073 = vunpack.c.l.b16 %v800
    %v1074 = vunpack.c.h.b16 %v800
    %v1075 = vunpack.c.l.b16 %v801
    %v1076 = vunpack.c.h.b16 %v801
    %v1077 = vunpack.c.l.b16 %v802
    %v1078 = vunpack.c.h.b16 %v802
    %v1079 = vunpack.c.l.b16 %v803
    %v1080 = vunpack.c.h.b16 %v803
    %v1081 = vunpack.c.l.b16 %v804
    %v1082 = vunpack.c.h.b16 %v804
    %v1083 = vunpack.c.l.b16 %v805
    %v1084 = vunpack.c.h.b16 %v805
    %v1085 = vunpack.c.l.b16 %v806
    %v1086 = vunpack.c.h.b16 %v806
    %v1087 = vunpack.c.l.b16 %v807
    %v1088 = vunpack.c.h.b16 %v807
    %v1089 = vunpack.c.l.b16 %v808
    %v1090 = vunpack.c.h.b16 %v808
    %v1091 = vunpack.c.l.b16 %v809
    %v1092 = vunpack.c.h.b16 %v809
    %v1093 = vunpack.c.l.b16 %v810
    %v1094 = vunpack.c.h.b16 %v810
    %v1095 = vunpack.c.l.b16 %v811
    %v1096 = vunpack.c.h.b16 %v811
    %v1097 = vunpack.c.l.b16 %v812
    %v1098 = vunpack.c.h.b16 %v812
    %v1099 = vunpack.c.l.b16 %v813
    %v1100 = vunpack.c.h.b16 %v813
    %v1101 = vunpack.c.l.b16 %v814
    %v1102 = vunpack.c.h.b16 %v814
    %v1103 = vunpack.c.l.b16 %v815
    %v1104 = vunpack.c.h.b16 %v815
    %v1105 = vunpack.c.l.b16 %v816
    %v1106 = vunpack.c.h.b16 %v816
    %v1107 = vunpack.c.l.b16 %v817
    %v1108 = vunpack.c.h.b16 %v817
    %v1109 = vunpack.c.l.b16 %v818
    %v1110 = vunpack.c.h.b16 %v818
    %v1111 = vunpack.c.l.b16 %v819
    %v1112 = vunpack.c.h.b16 %v819
    %v1113 = vunpack.c.l.b16 %v820
    %v1114 = vunpack.c.h.b16 %v820
    %v1115 = vunpack.c.l.b16 %v821
    %v1116 = vunpack.c.h.b16 %v821
    %v1117 = vunpack.c.l.b16 %v822
    %v1118 = vunpack.c.h.b16 %v822
    %v1119 = vunpack.c.l.b16 %v823
    %v1120 = vunpack.c.h.b16 %v823
    %v1121 = vunpack.c.l.b16 %v824
    %v1122 = vunpack.c.h.b16 %v824
    %v1123 = vunpack.c.l.b16 %v825
    %v1124 = vunpack.c.h.b16 %v825
    %v1125 = vunpack.c.l.b16 %v826
    %v1126 = vunpack.c.h.b16 %v826
    %v1127 = vunpack.c.l.b16 %v827
    %v1128 = vunpack.c.h.b16 %v827
    %v1129 = vunpack.c.l.b16 %v828
    %v1130 = vunpack.c.h.b16 %v828
    %v1131 = vunpack.c.l.b16 %v829
    %v1132 = vunpack.c.h.b16 %v829
    %v1133 = vunpack.c.l.b16 %v830
    %v1134 = vunpack.c.h.b16 %v830
    %v1135 = vunpack.c.l.b16 %v831
    %v1136 = vunpack.c.h.b16 %v831
    %v1137 = vunpack.c.l.b16 %v832
    %v1138 = vunpack.c.h.b16 %v832
    %v1139 = vunpack.c.l.b16 %v833
    %v1140 = vunpack.c.h.b16 %v833
    %v1141 = vunpack.c.l.b16 %v834
    %v1142 = vunpack.c.h.b16 %v834
    %v1143 = vunpack.c.l.b16 %v835
    %v1144 = vunpack.c.h.b16 %v835
    %v1145 = vunpack.c.l.b16 %v836
    %v1146 = vunpack.c.h.b16 %v836
    %v1147 = vunpack.c.l.b16 %v837
    %v1148 = vunpack.c.h.b16 %v837
    %v1149 = vunpack.c.l.b16 %v838
    %v1150 = vunpack.c.h.b16 %v838
    %v1151 = vunpack.c.l.b16 %v839
    %v1152 = vunpack.c.h.b16 %v839
    %v1153 = vunpack.c.l.b16 %v840
    %v1154 = vunpack.c.h.b16 %v840
    %v1155 = vunpack.c.l.b16 %v841
    %v1156 = vunpack.c.h.b16 %v841
    %v1157 = vunpack.c.l.b16 %v842
    %v1158 = vunpack.c.h.b16 %v842
    %v1159 = vunpack.c.l.b16 %v843
    %v1160 = vunpack.c.h.b16 %v843
    %v1161 = vunpack.c.l.b16 %v844
    %v1162 = vunpack.c.h.b16 %v844
    %v1163 = vunpack.c.l.b16 %v845
    %v1164 = vunpack.c.h.b16 %v845
    %v1165 = vunpack.c.l.b16 %v846
    %v1166 = vunpack.c.h.b16 %v846
    %v1167 = vunpack.c.l.b16 %v847
    %v1168 = vunpack.c.h.b16 %v847
    %v1169 = vunpack.c.l.b16 %v848
    %v1170 = vunpack.c.h.b16 %v848
    %v1171 = vunpack.c.l.b16 %v849
    %v1172 = vunpack.c.h.b16 %v849
    %v1173 = vunpack.c.l.b16 %v850
    %v1174 = vunpack.c.h.b16 %v850
    %v1175 = vunpack.c.l.b16 %v851
    %v1176 = vunpack.c.h.b16 %v851
    %v1177 = vunpack.c.l.b16 %v852
    %v1178 = vunpack.c.h.b16 %v852
    %v1179 = vunpack.c.l.b16 %v853
    %v1180 = vunpack.c.h.b16 %v853
    %v1181 = vunpack.c.l.b16 %v854
    %v1182 = vunpack.c.h.b16 %v854
    %v1183 = vunpack.c.l.b16 %v855
    %v1184 = vunpack.c.h.b16 %v855
    %v1185 = vunpack.c.l.b16 %v856
    %v1186 = vunpack.c.h.b16 %v856
    %v1187 = vunpack.c.l.b16 %v857
    %v1188 = vunpack.c.h.b16 %v857
    %v1189 = vunpack.c.l.b16 %v858
    %v1190 = vunpack.c.h.b16 %v858
    %v1191 = vunpack.c.l.b16 %v859
    %v1192 = vunpack.c.h.b16 %v859
    %v1193 = vunpack.c.l.b16 %v860
    %v1194 = vunpack.c.h.b16 %v860
    %v1195 = vunpack.c.l.b16 %v861
    %v1196 = vunpack.c.h.b16 %v861
    %v1197 = vunpack.c.l.b16 %v862
    %v1198 = vunpack.c.h.b16 %v862
    %v1199 = vunpack.c.l.b16 %v863
    %v1200 = vunpack.c.h.b16 %v863
    %v1201 = vunpack.c.l.b16 %v864
    %v1202 = vunpack.c.h.b16 %v864
    %v1203 = vunpack.c.l.b16 %v865
    %v1204 = vunpack.c.h.b16 %v865
    %v1205 = vunpack.c.l.b16 %v866
    %v1206 = vunpack.c.h.b16 %v866
    %v1207 = vunpack.c.l.b16 %v867
    %v1208 = vunpack.c.h.b16 %v867
    %v1209 = vunpack.c.l.b16 %v868
    %v1210 = vunpack.c.h.b16 %v868
    %v1211 = vunpack.c.l.b16 %v869
    %v1212 = vunpack.c.h.b16 %v869
    %v1213 = vunpack.c.l.b16 %v870
    %v1214 = vunpack.c.h.b16 %v870
    %v1215 = vunpack.c.l.b16 %v871
    %v1216 = vunpack.c.h.b16 %v871
    %v1217 = vunpack.c.l.b16 %v872
    %v1218 = vunpack.c.h.b16 %v872
    %v1219 = vunpack.c.l.b16 %v873
    %v1220 = vunpack.c.h.b16 %v873
    %v1221 = vunpack.c.l.b16 %v874
    %v1222 = vunpack.c.h.b16 %v874
    %v1223 = vunpack.c.l.b16 %v875
    %v1224 = vunpack.c.h.b16 %v875
    %v1225 = vunpack.c.l.b16 %v876
    %v1226 = vunpack.c.h.b16 %v876
    %v1227 = vunpack.c.l.b16 %v877
    %v1228 = vunpack.c.h.b16 %v877
    %v1229 = vunpack.c.l.b16 %v878
    %v1230 = vunpack.c.h.b16 %v878
    %v1231 = vunpack.c.l.b16 %v879
    %v1232 = vunpack.c.h.b16 %v879
    %v1233 = vunpack.c.l.b16 %v880
    %v1234 = vunpack.c.h.b16 %v880
    %v1235 = vunpack.c.l.b16 %v881
    %v1236 = vunpack.c.h.b16 %v881
    %v1237 = vunpack.c.l.b16 %v882
    %v1238 = vunpack.c.h.b16 %v882
    %v1239 = vunpack.c.l.b16 %v883
    %v1240 = vunpack.c.h.b16 %v883
    %v1241 = vunpack.c.l.b16 %v884
    %v1242 = vunpack.c.h.b16 %v884
    %v1243 = vunpack.c.l.b16 %v885
    %v1244 = vunpack.c.h.b16 %v885
    %v1245 = vunpack.c.l.b16 %v886
    %v1246 = vunpack.c.h.b16 %v886
    %v1247 = vunpack.c.l.b16 %v887
    %v1248 = vunpack.c.h.b16 %v887
    %v1249 = vunpack.c.l.b16 %v888
    %v1250 = vunpack.c.h.b16 %v888
    %v1251 = vunpack.c.l.b16 %v889
    %v1252 = vunpack.c.h.b16 %v889
    %v1253 = vunpack.c.l.b16 %v890
    %v1254 = vunpack.c.h.b16 %v890
    %v1255 = vunpack.c.l.b16 %v891
    %v1256 = vunpack.c.h.b16 %v891
    %v1257 = vunpack.c.l.b16 %v892
    %v1258 = vunpack.c.h.b16 %v892
    %v1259 = vunpack.c.l.b16 %v893
    %v1260 = vunpack.c.h.b16 %v893
    %v1261 = vunpack.c.l.b16 %v894
    %v1262 = vunpack.c.h.b16 %v894
    %v1263 = vunpack.c.l.b16 %v895
    %v1264 = vunpack.c.h.b16 %v895
    %v1265 = vunpack.c.l.b16 %v896
    %v1266 = vunpack.c.h.b16 %v896
    %v1267 = vunpack.c.l.b16 %v897
    %v1268 = vunpack.c.h.b16 %v897
    %v1269 = vunpack.c.l.b16 %v898
    %v1270 = vunpack.c.h.b16 %v898
    %v1271 = vunpack.c.l.b16 %v899
    %v1272 = vunpack.c.h.b16 %v899
    %v1273 = vunpack.c.l.b16 %v900
    %v1274 = vunpack.c.h.b16 %v900
    %v1275 = vunpack.c.l.b16 %v901
    %v1276 = vunpack.c.h.b16 %v901
    %v1277 = vunpack.c.l.b16 %v902
    %v1278 = vunpack.c.h.b16 %v902
    %v1279 = vunpack.c.l.b16 %v903
    %v1280 = vunpack.c.h.b16 %v903
    %v1281 = vunpack.c.l.b16 %v904
    %v1282 = vunpack.c.h.b16 %v904
    %v1283 = vunpack.c.l.b16 %v905
    %v1284 = vunpack.c.h.b16 %v905
    %v1285 = vunpack.c.l.b16 %v906
    %v1286 = vunpack.c.h.b16 %v906
    %v1287 = vunpack.c.l.b16 %v907
    %v1288 = vunpack.c.h.b16 %v907
    %v1289 = vunpack.c.l.b16 %v908
    %v1290 = vunpack.c.h.b16 %v908
    %v1291 = vunpack.c.l.b16 %v909
    %v1292 = vunpack.c.h.b16 %v909
    %v1293 = vunpack.c.l.b16 %v910
    %v1294 = vunpack.c.h.b16 %v910
    %v1295 = vunpack.c.l.b16 %v911
    %v1296 = vunpack.c.h.b16 %v911
    %v1297 = vpack.c.b16 %v1043, %v1041
    %v1298 = vpack.c.b16 %v1044, %v1042
    %v1299 = vpack.c.b16 %v1047, %v1045
    %v1300 = vpack.c.b16 %v1048, %v1046
    %v1301 = vpack.c.b16 %v1051, %v1049
    %v1302 = vpack.c.b16 %v1052, %v1050
    %v1303 = vpack.c.b16 %v1055, %v1053
    %v1304 = vpack.c.b16 %v1056, %v1054
    %v1305 = vpack.c.b16 %v1059, %v1057
    %v1306 = vpack.c.b16 %v1060, %v1058
    %v1307 = vpack.c.b16 %v1063, %v1061
    %v1308 = vpack.c.b16 %v1064, %v1062
    %v1309 = vpack.c.b16 %v1067, %v1065
    %v1310 = vpack.c.b16 %v1068, %v1066
    %v1311 = vpack.c.b16 %v1071, %v1069
    %v1312 = vpack.c.b16 %v1072, %v1070
    %v1313 = vpack.c.b16 %v1075, %v1073
    %v1314 = vpack.c.b16 %v1076, %v1074
    %v1315 = vpack.c.b16 %v1079, %v1077
    %v1316 = vpack.c.b16 %v1080, %v1078
    %v1317 = vpack.c.b16 %v1083, %v1081
    %v1318 = vpack.c.b16 %v1084, %v1082
    %v1319 = vpack.c.b16 %v1087, %v1085
    %v1320 = vpack.c.b16 %v1088, %v1086
    %v1321 = vpack.c.b16 %v1091, %v1089
    %v1322 = vpack.c.b16 %v1092, %v1090
    %v1323 = vpack.c.b16 %v1095, %v1093
    %v1324 = vpack.c.b16 %v1096, %v1094
    %v1325 = vpack.c.b16 %v1099, %v1097
    %v1326 = vpack.c.b16 %v1100, %v1098
    %v1327 = vpack.c.b16 %v1103, %v1101
    %v1328 = vpack.c.b16 %v1104, %v1102
    %v1329 = vpack.c.b16 %v1107, %v1105
    %v1330 = vpack.c.b16 %v1108, %v1106
    %v1331 = vpack.c.b16 %v1111, %v1109
    %v1332 = vpack.c.b16 %v1112, %v1110
    %v1333 = vpack.c.b16 %v1115, %v1113
    %v1334 = vpack.c.b16 %v1116, %v1114
    %v1335 = vpack.c.b16 %v1119, %v1117
    %v1336 = vpack.c.b16 %v1120, %v1118
    %v1337 = vpack.c.b16 %v1123, %v1121
    %v1338 = vpack.c.b16 %v1124, %v1122
    %v1339 = vpack.c.b16 %v1127, %v1125
    %v1340 = vpack.c.b16 %v1128, %v1126
    %v1341 = vpack.c.b16 %v1131, %v1129
    %v1342 = vpack.c.b16 %v1132, %v1130
    %v1343 = vpack.c.b16 %v1135, %v1133
    %v1344 = vpack.c.b16 %v1136, %v1134
    %v1345 = vpack.c.b16 %v1139, %v1137
    %v1346 = vpack.c.b16 %v1140, %v1138
    %v1347 = vpack.c.b16 %v1143, %v1141
    %v1348 = vpack.c.b16 %v1144, %v1142
    %v1349 = vpack.c.b16 %v1147, %v1145
    %v1350 = vpack.c.b16 %v1148, %v1146
    %v1351 = vpack.c.b16 %v1151, %v1149
    %v1352 = vpack.c.b16 %v1152, %v1150
    %v1353 = vpack.c.b16 %v1155, %v1153
    %v1354 = vpack.c.b16 %v1156, %v1154
    %v1355 = vpack.c.b16 %v1159, %v1157
    %v1356 = vpack.c.b16 %v1160, %v1158
    %v1357 = vpack.c.b16 %v1163, %v1161
    %v1358 = vpack.c.b16 %v1164, %v1162
    %v1359 = vpack.c.b16 %v1167, %v1165
    %v1360 = vpack.c.b16 %v1168, %v1166
    %v1361 = vpack.c.b16 %v1171, %v1169
    %v1362 = vpack.c.b16 %v1172, %v1170
    %v1363 = vpack.c.b16 %v1175, %v1173
    %v1364 = vpack.c.b16 %v1176, %v1174
    %v1365 = vpack.c.b16 %v1179, %v1177
    %v1366 = vpack.c.b16 %v1180, %v1178
    %v1367 = vpack.c.b16 %v1183, %v1181
    %v1368 = vpack.c.b16 %v1184, %v1182
    %v1369 = vpack.c.b16 %v1187, %v1185
    %v1370 = vpack.c.b16 %v1188, %v1186
    %v1371 = vpack.c.b16 %v1191, %v1189
    %v1372 = vpack.c.b16 %v1192, %v1190
    %v1373 = vpack.c.b16 %v1195, %v1193
    %v1374 = vpack.c.b16 %v1196, %v1194
    %v1375 = vpack.c.b16 %v1199, %v1197
    %v1376 = vpack.c.b16 %v1200, %v1198
    %v1377 = vpack.c.b16 %v1203, %v1201
    %v1378 = vpack.c.b16 %v1204, %v1202
    %v1379 = vpack.c.b16 %v1207, %v1205
    %v1380 = vpack.c.b16 %v1208, %v1206
    %v1381 = vpack.c.b16 %v1211, %v1209
    %v1382 = vpack.c.b16 %v1212, %v1210
    %v1383 = vpack.c.b16 %v1215, %v1213
    %v1384 = vpack.c.b16 %v1216, %v1214
    %v1385 = vpack.c.b16 %v1219, %v1217
    %v1386 = vpack.c.b16 %v1220, %v1218
    %v1387 = vpack.c.b16 %v1223, %v1221
    %v1388 = vpack.c.b16 %v1224, %v1222
    %v1389 = vpack.c.b16 %v1227, %v1225
    %v1390 = vpack.c.b16 %v1228, %v1226
    %v1391 = vpack.c.b16 %v1231, %v1229
    %v1392 = vpack.c.b16 %v1232, %v1230
    %v1393 = vpack.c.b16 %v1235, %v1233
    %v1394 = vpack.c.b16 %v1236, %v1234
    %v1395 = vpack.c.b16 %v1239, %v1237
    %v1396 = vpack.c.b16 %v1240, %v1238
    %v1397 = vpack.c.b16 %v1243, %v1241
    %v1398 = vpack.c.b16 %v1244, %v1242
    %v1399 = vpack.c.b16 %v1247, %v1245
    %v1400 = vpack.c.b16 %v1248, %v1246
    %v1401 = vpack.c.b16 %v1251, %v1249
    %v1402 = vpack.c.b16 %v1252, %v1250
    %v1403 = vpack.c.b16 %v1255, %v1253
    %v1404 = vpack.c.b16 %v1256, %v1254
    %v1405 = vpack.c.b16 %v1259, %v1257
    %v1406 = vpack.c.b16 %v1260, %v1258
    %v1407 = vpack.c.b16 %v1263, %v1261
    %v1408 = vpack.c.b16 %v1264, %v1262
    %v1409 = vpack.c.b16 %v1267, %v1265
    %v1410 = vpack.c.b16 %v1268, %v1266
    %v1411 = vpack.c.b16 %v1271, %v1269
    %v1412 = vpack.c.b16 %v1272, %v1270
    %v1413 = vpack.c.b16 %v1275, %v1273
    %v1414 = vpack.c.b16 %v1276, %v1274
    %v1415 = vpack.c.b16 %v1279, %v1277
    %v1416 = vpack.c.b16 %v1280, %v1278
    %v1417 = vpack.c.b16 %v1283, %v1281
    %v1418 = vpack.c.b16 %v1284, %v1282
    %v1419 = vpack.c.b16 %v1287, %v1285
    %v1420 = vpack.c.b16 %v1288, %v1286
    %v1421 = vpack.c.b16 %v1291, %v1289
    %v1422 = vpack.c.b16 %v1292, %v1290
    %v1423 = vpack.c.b16 %v1295, %v1293
    %v1424 = vpack.c.b16 %v1296, %v1294
    %v1554 = vlaneseq
    %v1555 = vshrl.u32 %v1554, 7
    %v1556 = vsub.s32 0, %v1555
    %v1557 = vrot.slane %v912, %v1556
    %v1558 = vlaneseq
    %v1559 = vshrl.u32 %v1558, 7
    %v1560 = vsub.s32 1, %v1559
    %v1561 = vrot.slane %v912, %v1560
    %1564 = vmatprep.subr.bf16.mxu0 %v1298
    %1565 = vmatpush1.bf16.msra.mxu0 %v1297
    %1566 = vmatprep.subr.bf16.mxu0 %v1300
    %1567 = vmatpush1.bf16.msra.mxu0 %v1299
    %1568 = vmatprep.subr.bf16.mxu0 %v1302
    %1569 = vmatpush1.bf16.msra.mxu0 %v1301
    %1570 = vmatprep.subr.bf16.mxu0 %v1304
    %1571 = vmatpush1.bf16.msra.mxu0 %v1303
    %1572 = vmatprep.subr.bf16.mxu0 %v1306
    %1573 = vmatpush1.bf16.msra.mxu0 %v1305
    %1574 = vmatprep.subr.bf16.mxu0 %v1308
    %1575 = vmatpush1.bf16.msra.mxu0 %v1307
    %1576 = vmatprep.subr.bf16.mxu0 %v1310
    %1577 = vmatpush1.bf16.msra.mxu0 %v1309
    %1578 = vmatprep.subr.bf16.mxu0 %v1312
    %1579 = vmatpush1.bf16.msra.mxu0 %v1311
    %1580 = vmatprep.subr.bf16.mxu0 %v1314
    %1581 = vmatpush1.bf16.msra.mxu0 %v1313
    %1582 = vmatprep.subr.bf16.mxu0 %v1316
    %1583 = vmatpush1.bf16.msra.mxu0 %v1315
    %1584 = vmatprep.subr.bf16.mxu0 %v1318
    %1585 = vmatpush1.bf16.msra.mxu0 %v1317
    %1586 = vmatprep.subr.bf16.mxu0 %v1320
    %1587 = vmatpush1.bf16.msra.mxu0 %v1319
    %1588 = vmatprep.subr.bf16.mxu0 %v1322
    %1589 = vmatpush1.bf16.msra.mxu0 %v1321
    %1590 = vmatprep.subr.bf16.mxu0 %v1324
    %1591 = vmatpush1.bf16.msra.mxu0 %v1323
    %1592 = vmatprep.subr.bf16.mxu0 %v1326
    %1593 = vmatpush1.bf16.msra.mxu0 %v1325
    %1594 = vmatprep.subr.bf16.mxu0 %v1328
    %1595 = vmatpush1.bf16.msra.mxu0 %v1327
    %1596 = vmatprep.mubr.bf16.mxu0 %v777
    %1597 = vmatmul.mubr.bf16.gmra.mrb[0].mxu0 %v776
    %v1598 = vpop.f32.mrb[0].mxu0
    %v1599 = vadd.f32 %v1557, %v1598
    %v1600 = vpop.f32.mrb[0].mxu0
    %v1601 = vadd.f32 %v1561, %v1600
    %v1602 = vpop.f32.mrb[0].mxu0
    %v1603 = vpop.f32.mrb[0].mxu0
    %1604 = vdwg.mxu0
    %1605 = vmatprep.subr.bf16.mxu0 %v1330
    %1606 = vmatpush1.bf16.msra.mxu0 %v1329
    %1607 = vmatprep.subr.bf16.mxu0 %v1332
    %1608 = vmatpush1.bf16.msra.mxu0 %v1331
    %1609 = vmatprep.subr.bf16.mxu0 %v1334
    %1610 = vmatpush1.bf16.msra.mxu0 %v1333
    %1611 = vmatprep.subr.bf16.mxu0 %v1336
    %1612 = vmatpush1.bf16.msra.mxu0 %v1335
    %1613 = vmatprep.subr.bf16.mxu0 %v1338
    %1614 = vmatpush1.bf16.msra.mxu0 %v1337
    %1615 = vmatprep.subr.bf16.mxu0 %v1340
    %1616 = vmatpush1.bf16.msra.mxu0 %v1339
    %1617 = vmatprep.subr.bf16.mxu0 %v1342
    %1618 = vmatpush1.bf16.msra.mxu0 %v1341
    %1619 = vmatprep.subr.bf16.mxu0 %v1344
    %1620 = vmatpush1.bf16.msra.mxu0 %v1343
    %1621 = vmatprep.subr.bf16.mxu0 %v1346
    %1622 = vmatpush1.bf16.msra.mxu0 %v1345
    %1623 = vmatprep.subr.bf16.mxu0 %v1348
    %1624 = vmatpush1.bf16.msra.mxu0 %v1347
    %1625 = vmatprep.subr.bf16.mxu0 %v1350
    %1626 = vmatpush1.bf16.msra.mxu0 %v1349
    %1627 = vmatprep.subr.bf16.mxu0 %v1352
    %1628 = vmatpush1.bf16.msra.mxu0 %v1351
    %1629 = vmatprep.subr.bf16.mxu0 %v1354
    %1630 = vmatpush1.bf16.msra.mxu0 %v1353
    %1631 = vmatprep.subr.bf16.mxu0 %v1356
    %1632 = vmatpush1.bf16.msra.mxu0 %v1355
    %1633 = vmatprep.subr.bf16.mxu0 %v1358
    %1634 = vmatpush1.bf16.msra.mxu0 %v1357
    %1635 = vmatprep.subr.bf16.mxu0 %v1360
    %1636 = vmatpush1.bf16.msra.mxu0 %v1359
    %1637 = vmatprep.mubr.bf16.mxu0 %v779
    %1638 = vmatmul.mubr.bf16.gmra.mrb[0].mxu0 %v778
    %v1639 = vpop.f32.mrb[0].mxu0
    %v1640 = vadd.f32 %v1599, %v1639
    %v1641 = vpop.f32.mrb[0].mxu0
    %v1642 = vadd.f32 %v1601, %v1641
    %v1643 = vpop.f32.mrb[0].mxu0
    %v1644 = vpop.f32.mrb[0].mxu0
    %1645 = vdwg.mxu0
    %1646 = vmatprep.subr.bf16.mxu0 %v1362
    %1647 = vmatpush1.bf16.msra.mxu0 %v1361
    %1648 = vmatprep.subr.bf16.mxu0 %v1364
    %1649 = vmatpush1.bf16.msra.mxu0 %v1363
    %1650 = vmatprep.subr.bf16.mxu0 %v1366
    %1651 = vmatpush1.bf16.msra.mxu0 %v1365
    %1652 = vmatprep.subr.bf16.mxu0 %v1368
    %1653 = vmatpush1.bf16.msra.mxu0 %v1367
    %1654 = vmatprep.subr.bf16.mxu0 %v1370
    %1655 = vmatpush1.bf16.msra.mxu0 %v1369
    %1656 = vmatprep.subr.bf16.mxu0 %v1372
    %1657 = vmatpush1.bf16.msra.mxu0 %v1371
    %1658 = vmatprep.subr.bf16.mxu0 %v1374
    %1659 = vmatpush1.bf16.msra.mxu0 %v1373
    %1660 = vmatprep.subr.bf16.mxu0 %v1376
    %1661 = vmatpush1.bf16.msra.mxu0 %v1375
    %1662 = vmatprep.subr.bf16.mxu0 %v1378
    %1663 = vmatpush1.bf16.msra.mxu0 %v1377
    %1664 = vmatprep.subr.bf16.mxu0 %v1380
    %1665 = vmatpush1.bf16.msra.mxu0 %v1379
    %1666 = vmatprep.subr.bf16.mxu0 %v1382
    %1667 = vmatpush1.bf16.msra.mxu0 %v1381
    %1668 = vmatprep.subr.bf16.mxu0 %v1384
    %1669 = vmatpush1.bf16.msra.mxu0 %v1383
    %1670 = vmatprep.subr.bf16.mxu0 %v1386
    %1671 = vmatpush1.bf16.msra.mxu0 %v1385
    %1672 = vmatprep.subr.bf16.mxu0 %v1388
    %1673 = vmatpush1.bf16.msra.mxu0 %v1387
    %1674 = vmatprep.subr.bf16.mxu0 %v1390
    %1675 = vmatpush1.bf16.msra.mxu0 %v1389
    %1676 = vmatprep.subr.bf16.mxu0 %v1392
    %1677 = vmatpush1.bf16.msra.mxu0 %v1391
    %1678 = vmatprep.mubr.bf16.mxu0 %v781
    %1679 = vmatmul.mubr.bf16.gmra.mrb[0].mxu0 %v780
    %v1680 = vpop.f32.mrb[0].mxu0
    %v1681 = vadd.f32 %v1640, %v1680
    %v1682 = vpop.f32.mrb[0].mxu0
    %v1683 = vadd.f32 %v1642, %v1682
    %v1684 = vpop.f32.mrb[0].mxu0
    %v1685 = vpop.f32.mrb[0].mxu0
    %1686 = vdwg.mxu0
    %1687 = vmatprep.subr.bf16.mxu0 %v1394
    %1688 = vmatpush1.bf16.msra.mxu0 %v1393
    %1689 = vmatprep.subr.bf16.mxu0 %v1396
    %1690 = vmatpush1.bf16.msra.mxu0 %v1395
    %1691 = vmatprep.subr.bf16.mxu0 %v1398
    %1692 = vmatpush1.bf16.msra.mxu0 %v1397
    %1693 = vmatprep.subr.bf16.mxu0 %v1400
    %1694 = vmatpush1.bf16.msra.mxu0 %v1399
    %1695 = vmatprep.subr.bf16.mxu0 %v1402
    %1696 = vmatpush1.bf16.msra.mxu0 %v1401
    %1697 = vmatprep.subr.bf16.mxu0 %v1404
    %1698 = vmatpush1.bf16.msra.mxu0 %v1403
    %1699 = vmatprep.subr.bf16.mxu0 %v1406
    %1700 = vmatpush1.bf16.msra.mxu0 %v1405
    %1701 = vmatprep.subr.bf16.mxu0 %v1408
    %1702 = vmatpush1.bf16.msra.mxu0 %v1407
    %1703 = vmatprep.subr.bf16.mxu0 %v1410
    %1704 = vmatpush1.bf16.msra.mxu0 %v1409
    %1705 = vmatprep.subr.bf16.mxu0 %v1412
    %1706 = vmatpush1.bf16.msra.mxu0 %v1411
    %1707 = vmatprep.subr.bf16.mxu0 %v1414
    %1708 = vmatpush1.bf16.msra.mxu0 %v1413
    %1709 = vmatprep.subr.bf16.mxu0 %v1416
    %1710 = vmatpush1.bf16.msra.mxu0 %v1415
    %1711 = vmatprep.subr.bf16.mxu0 %v1418
    %1712 = vmatpush1.bf16.msra.mxu0 %v1417
    %1713 = vmatprep.subr.bf16.mxu0 %v1420
    %1714 = vmatpush1.bf16.msra.mxu0 %v1419
    %1715 = vmatprep.subr.bf16.mxu0 %v1422
    %1716 = vmatpush1.bf16.msra.mxu0 %v1421
    %1717 = vmatprep.subr.bf16.mxu0 %v1424
    %1718 = vmatpush1.bf16.msra.mxu0 %v1423
    %1719 = vmatprep.mubr.bf16.mxu0 %v783
    %1720 = vmatmul.mubr.bf16.gmra.mrb[0].mxu0 %v782
    %v1721 = vpop.f32.mrb[0].mxu0
    %v1722 = vadd.f32 %v1681, %v1721
    %v1723 = vpop.f32.mrb[0].mxu0
    %v1724 = vadd.f32 %v1683, %v1723
    %v1725 = vpop.f32.mrb[0].mxu0
    %v1726 = vpop.f32.mrb[0].mxu0
    %1727 = vdwg.mxu0
    %v1730 = vcombine.low %v1722, %v1724
    %v1732 = vunpack.c.l.s4 1966171168
    %v1733 = vunpack.c.0.s8 %v1732
    %v1734 = vlaneseq
    %v1735 = vshrl.u32 %v1734, 7
    %v1736 = vsub.s32 %v1733, %v1735
    %v1737 = vrot.slane %v1730, %v1736
    %v1739 = vunpack.c.l.s4 1966171168
    %v1740 = vunpack.c.0.s8 %v1739
    %v1741 = vlaneseq
    %v1742 = vshrl.u32 %v1741, 7
    %v1743 = vsub.s32 %v1740, %v1742
    %v1744 = vrot.slane %v1737, %v1743
    %v1746 = vlaneseq
    %vm1747 = vcmp.ge.s32.totalorder %v1746, 0
    %vm1748 = vcmp.lt.s32.totalorder %v1746, 256
    %vm1749 = vmand %vm1747, %vm1748
    %1750 = vst.msk [vmem:[#allocation6] sm:$0x3] %vm1749, %v1744
    // Predicated region
    $region38: #{decoder_forward.1} parent=1 // pred_check
      _
    $region39: #{decoder_forward.1} parent=1 // pred_check_branch
      %1752 = sbr.rel (0) target = $region41
    $region40: #{decoder_forward.1} parent=1 // pred_region
      %s1754 = ssub.s32 32, 32
      %1755 = vsyncadd [#allocation5], %s1754
      %s1757 = sshll.u32 [#allocation6], 4
      %s1758 = int_to_ptr.vmem [resolvable:$true] %s1757
      %1760 = dma.vmem_to_hbm [thread:$0]  %s1758, 32, %s7, [#allocation5]
    $region41: #{decoder_forward.1} parent=1 // pred_fallthru
      _
    // Predicated region
    $region42: #{decoder_forward.1} parent=1 // pred_check
      _
    $region43: #{decoder_forward.1} parent=1 // pred_check_branch
      %1762 = sbr.rel (0) target = $region45
    $region44: #{decoder_forward.1} parent=1 // pred_region
      %1763 = dma.done [#allocation5], 32
    $region45: #{decoder_forward.1} parent=1 // pred_fallthru
      _
    %1764 = vsyncpa [#allocation4], 1
    %1765 = vsyncpa [#allocation5], 1

</llo_original>
